<compile_context>
chip_gen: v6e
topology: v6e:2x2x1
jax: 0.10.0
libtpu: 0.0.40
codegen_flags: <defaults>
</compile_context>

<pallas_src>
import numpy as np
import jax
import jax.numpy as jnp
from jax.experimental import pallas as pl
from jax.experimental.pallas import tpu as pltpu

BOARD_ROWS = 3
BOARD_COLS = 3
N_IN = BOARD_ROWS * BOARD_COLS          # 9
C1 = 32 * N_IN                          # 288
C2 = 64 * N_IN                          # 576

TB_MAX = 2048                           # batch tile (lane dim); sized for v7x 64 MiB VMEM


def _round_up(n, m):
    return ((n + m - 1) // m) * m


# ----------------------------------------------------------------------------
# Parameter setup glue: turn a 3x3 'same' conv on a 3x3 board into a dense matrix.
# ----------------------------------------------------------------------------
def conv3x3_same_to_dense(w):
    """w: (Cout, Cin, 3, 3)  ->  M: (Cin*9, Cout*9) with y_flat = x_flat @ M.

    Reproduces nn.Conv2d(Cin, Cout, 3, stride=1, padding=1) on a (Cin, 3, 3) board,
    with x_flat / y_flat flattened in PyTorch (channel, row, col) order.
    """
    w_np = np.asarray(w, dtype=np.float32)
    cout, cin, _, _ = w_np.shape
    m = np.zeros((cin, 3, 3, cout, 3, 3), dtype=np.float32)
    for i in range(3):          # output row
        for j in range(3):      # output col
            for di in range(3):
                for dj in range(3):
                    p, q = i + di - 1, j + dj - 1   # padded-input coordinate
                    if 0 <= p < 3 and 0 <= q < 3:
                        # out[co, i, j] += W[co, ci, di, dj] * x[ci, p, q]
                        m[:, p, q, :, i, j] += w_np[:, :, di, dj].T
    return jnp.asarray(m.reshape(cin * 9, cout * 9))


# ----------------------------------------------------------------------------
# Pallas kernel.  Per grid step: one batch tile of TB samples, batch in the lane dim.
#   x: (9, TB)  -> h1: (288, TB) -> h2: (576, TB) -> out: (1, TB)
# ----------------------------------------------------------------------------
def tictactoe_kernel(x_ref, w1_ref, b1_ref, w2_ref, b2_ref, wf_ref, bf_ref, o_ref):
    # conv1 as dense matmul on the MXU (bf16 inputs, f32 accumulation).
    x = x_ref[...].astype(jnp.bfloat16)                                   # (9, TB)
    h1 = jnp.dot(w1_ref[...], x, preferred_element_type=jnp.float32)      # (288, TB) f32
    h1 = jnp.maximum(h1 + b1_ref[...], 0.0)                               # bias+relu in f32 (VPU)

    # conv2 as dense matmul (dominant MXU work).
    h2 = jnp.dot(w2_ref[...], h1.astype(jnp.bfloat16),
                 preferred_element_type=jnp.float32)                      # (576, TB) f32
    h2 = jnp.maximum(h2 + b2_ref[...], 0.0)

    # fc (576 -> 1): VPU multiply + sublane reduction instead of an N=1 MXU matmul.
    # Result is (1, TB): lane-dense, unmasked stores.
    logit = jnp.sum(h2 * wf_ref[...], axis=0, keepdims=True) + bf_ref[...]  # (1, TB) f32

    # sigmoid = 1 / (1 + exp(-x)): exp and approximate reciprocal both run on the EUP slot.
    o_ref[...] = pl.reciprocal(1.0 + jnp.exp(-logit), approx=True)


def tictactoe_forward(x, params, *, tb=None):
    """x: anything reshapeable to (B, 1, 3, 3), like the PyTorch forward. Returns (B, 1)."""
    w1t, b1, w2t, b2, wf, bf = params
    x_flat = jnp.reshape(x, (-1, N_IN)).astype(jnp.float32)
    b = x_flat.shape[0]

    if tb is None:
        tb = min(TB_MAX, _round_up(max(b, 1), 128))
    assert tb % 128 == 0, "batch tile must be lane-dense (multiple of 128)"
    b_pad = _round_up(max(b, 1), tb)
    n_tiles = b_pad // tb

    # Pad batch and transpose to batch-in-lanes layout (tiny, done once in XLA).
    x_t = jnp.pad(x_flat, ((0, b_pad - b), (0, 0))).T                     # (9, b_pad)

    out = pl.pallas_call(
        tictactoe_kernel,
        out_shape=jax.ShapeDtypeStruct((1, b_pad), jnp.float32),
        grid=(n_tiles,),
        in_specs=[
            pl.BlockSpec((N_IN, tb), lambda i: (0, i)),     # x tile: pipelined per grid step
            pl.BlockSpec((C1, N_IN), lambda i: (0, 0)),     # resident weights (no re-DMA):
            pl.BlockSpec((C1, 1), lambda i: (0, 0)),
            pl.BlockSpec((C2, C1), lambda i: (0, 0)),
            pl.BlockSpec((C2, 1), lambda i: (0, 0)),
            pl.BlockSpec((C2, 1), lambda i: (0, 0)),
            pl.BlockSpec((1, 1), lambda i: (0, 0)),
        ],
        out_specs=pl.BlockSpec((1, tb), lambda i: (0, i)),  # lane-dense output tile
        compiler_params=pltpu.CompilerParams(
            dimension_semantics=("parallel",),              # shard batch tiles across TCs (v7x)
            vmem_limit_bytes=48 * 1024 * 1024,              # headroom, still < v7x 64 MiB
        ),
    )(x_t, w1t, b1, w2t, b2, wf, bf)

    return out[0, :b][:, None]                              # (B, 1)


def make_params(conv1_w, conv1_b, conv2_w, conv2_b, fc_w, fc_b):
    """Convert PyTorch-layout parameters into the kernel's feature-major dense form."""
    m1 = conv3x3_same_to_dense(conv1_w)                     # (9, 288)
    m2 = conv3x3_same_to_dense(conv2_w)                     # (288, 576)
    w1t = m1.T.astype(jnp.bfloat16)                         # (288, 9)   MXU operand
    w2t = m2.T.astype(jnp.bfloat16)                         # (576, 288) MXU operand
    b1 = jnp.repeat(conv1_b.astype(jnp.float32), N_IN)[:, None]   # (288, 1) f32
    b2 = jnp.repeat(conv2_b.astype(jnp.float32), N_IN)[:, None]   # (576, 1) f32
    wf = fc_w.astype(jnp.float32).T                         # (576, 1) f32 (VPU/XLU final layer)
    bf = fc_b.astype(jnp.float32).reshape(1, 1)             # (1, 1)
    return (w1t, b1, w2t, b2, wf, bf)


# ----------------------------------------------------------------------------
# Pure-JAX reference (uses XLA conv) for a correctness check.
# ----------------------------------------------------------------------------
def reference_forward(x, conv1_w, conv1_b, conv2_w, conv2_b, fc_w, fc_b):
    xb = jnp.reshape(x, (-1, 1, BOARD_ROWS, BOARD_COLS)).astype(jnp.float32)
    dn = jax.lax.conv_dimension_numbers(xb.shape, conv1_w.shape, ("NCHW", "OIHW", "NCHW"))
    h = jax.lax.conv_general_dilated(xb, conv1_w, (1, 1), [(1, 1), (1, 1)],
                                     dimension_numbers=dn)
    h = jax.nn.relu(h + conv1_b[None, :, None, None])
    dn2 = jax.lax.conv_dimension_numbers(h.shape, conv2_w.shape, ("NCHW", "OIHW", "NCHW"))
    h = jax.lax.conv_general_dilated(h, conv2_w, (1, 1), [(1, 1), (1, 1)],
                                     dimension_numbers=dn2)
    h = jax.nn.relu(h + conv2_b[None, :, None, None])
    h = jnp.reshape(h, (h.shape[0], -1))
    return jax.nn.sigmoid(h @ fc_w.T + fc_b)


if __name__ == "__main__":
    key = jax.random.PRNGKey(0)
    k1, k2, k3, k4, k5, k6, kx, kx2 = jax.random.split(key, 8)

    # Deterministic synthetic parameters (shapes from nn.Module.__init__).
    conv1_w = jax.random.normal(k1, (32, 1, 3, 3), jnp.float32) * 0.10
    conv1_b = jax.random.normal(k2, (32,), jnp.float32) * 0.10
    conv2_w = jax.random.normal(k3, (64, 32, 3, 3), jnp.float32) * 0.05
    conv2_b = jax.random.normal(k4, (64,), jnp.float32) * 0.05
    fc_w = jax.random.normal(k5, (1, 64 * BOARD_ROWS * BOARD_COLS), jnp.float32) * 0.05
    fc_b = jax.random.normal(k6, (1,), jnp.float32) * 0.05

    params = make_params(conv1_w, conv1_b, conv2_w, conv2_b, fc_w, fc_b)

    # Example input: batch of 2 tic-tac-toe boards, NCHW (B, 1, 3, 3).
    x = jax.random.normal(kx, (2, 1, BOARD_ROWS, BOARD_COLS), jnp.float32)
    out = jax.block_until_ready(tictactoe_forward(x, params))
    ref = reference_forward(x, conv1_w, conv1_b, conv2_w, conv2_b, fc_w, fc_b)
    np.testing.assert_allclose(np.asarray(out), np.asarray(ref), rtol=2e-2, atol=2e-2)
    assert out.shape == (2, 1)

    # Second check: non-multiple batch with a small forced tile -> multi-step grid,
    # exercises padding, resident-weight index maps and the batch pipeline.
    x2 = jax.random.normal(kx2, (300, 1, BOARD_ROWS, BOARD_COLS), jnp.float32)
    out2 = jax.block_until_ready(tictactoe_forward(x2, params, tb=128))
    ref2 = reference_forward(x2, conv1_w, conv1_b, conv2_w, conv2_b, fc_w, fc_b)
    np.testing.assert_allclose(np.asarray(out2), np.asarray(ref2), rtol=2e-2, atol=2e-2)
    assert out2.shape == (300, 1)

    print("KERNEL_OK")
</pallas_src>

<mosaic_0001>
module attributes {stable_mosaic.version = 11 : i64} {
  func.func @tictactoe_kernel(%arg0: i32, %arg1: memref<9x128xf32, #tpu.memory_space<vmem>>, %arg2: memref<288x9xbf16, #tpu.memory_space<vmem>>, %arg3: memref<288x1xf32, #tpu.memory_space<vmem>>, %arg4: memref<576x288xbf16, #tpu.memory_space<vmem>>, %arg5: memref<576x1xf32, #tpu.memory_space<vmem>>, %arg6: memref<576x1xf32, #tpu.memory_space<vmem>>, %arg7: memref<1x1xf32, #tpu.memory_space<vmem>>, %arg8: memref<1x128xf32, #tpu.memory_space<vmem>>) attributes {dimension_semantics = [#tpu.dimension_semantics<parallel>], iteration_bounds = array<i64: 1>, scalar_prefetch = 0 : i64, scratch_operands = 0 : i64, tpu.core_type = #tpu.core_type<tc>, window_params = [{transform_indices = @transform_0, window_bounds = array<i64: 9, 128>}, {pipeline_mode = #tpu.pipeline_mode<synchronous>, transform_indices = @transform_1, window_bounds = array<i64: 288, 9>}, {pipeline_mode = #tpu.pipeline_mode<synchronous>, transform_indices = @transform_2, window_bounds = array<i64: 288, 1>}, {pipeline_mode = #tpu.pipeline_mode<synchronous>, transform_indices = @transform_3, window_bounds = array<i64: 576, 288>}, {pipeline_mode = #tpu.pipeline_mode<synchronous>, transform_indices = @transform_4, window_bounds = array<i64: 576, 1>}, {pipeline_mode = #tpu.pipeline_mode<synchronous>, transform_indices = @transform_5, window_bounds = array<i64: 576, 1>}, {pipeline_mode = #tpu.pipeline_mode<synchronous>, transform_indices = @transform_6, window_bounds = array<i64: 1, 1>}, {transform_indices = @transform_7, window_bounds = array<i64: 1, 128>}]} {
    %c0 = arith.constant 0 : index
    %c0_0 = arith.constant 0 : index
    %0 = vector.load %arg1[%c0, %c0_0] : memref<9x128xf32, #tpu.memory_space<vmem>>, vector<9x128xf32>
    %1 = arith.truncf %0 : vector<9x128xf32> to vector<9x128xbf16>
    %c0_1 = arith.constant 0 : index
    %c0_2 = arith.constant 0 : index
    %2 = vector.load %arg2[%c0_1, %c0_2] : memref<288x9xbf16, #tpu.memory_space<vmem>>, vector<288x9xbf16>
    %cst = arith.constant dense<0.000000e+00> : vector<288x128xf32>
    %3 = tpu.matmul %2, %1, %cst {dimension_numbers = #tpu.dot_dimension_numbers<[1], [0], [0], [1], [0, 0, 1, 1], [], []>} : vector<288x9xbf16>, vector<9x128xbf16>, vector<288x128xf32> -> vector<288x128xf32>
    %c0_3 = arith.constant 0 : index
    %c0_4 = arith.constant 0 : index
    %4 = vector.load %arg3[%c0_3, %c0_4] : memref<288x1xf32, #tpu.memory_space<vmem>>, vector<288x1xf32>
    %5 = vector.broadcast %4 : vector<288x1xf32> to vector<288x128xf32>
    %6 = arith.addf %3, %5 : vector<288x128xf32>
    %cst_5 = arith.constant 0.000000e+00 : f32
    %7 = vector.broadcast %cst_5 : f32 to vector<288x128xf32>
    %8 = arith.maximumf %6, %7 : vector<288x128xf32>
    %c0_6 = arith.constant 0 : index
    %c0_7 = arith.constant 0 : index
    %9 = vector.load %arg4[%c0_6, %c0_7] : memref<576x288xbf16, #tpu.memory_space<vmem>>, vector<576x288xbf16>
    %10 = arith.truncf %8 : vector<288x128xf32> to vector<288x128xbf16>
    %cst_8 = arith.constant dense<0.000000e+00> : vector<576x128xf32>
    %11 = tpu.matmul %9, %10, %cst_8 {dimension_numbers = #tpu.dot_dimension_numbers<[1], [0], [0], [1], [0, 0, 1, 1], [], []>} : vector<576x288xbf16>, vector<288x128xbf16>, vector<576x128xf32> -> vector<576x128xf32>
    %c0_9 = arith.constant 0 : index
    %c0_10 = arith.constant 0 : index
    %12 = vector.load %arg5[%c0_9, %c0_10] : memref<576x1xf32, #tpu.memory_space<vmem>>, vector<576x1xf32>
    %13 = vector.broadcast %12 : vector<576x1xf32> to vector<576x128xf32>
    %14 = arith.addf %11, %13 : vector<576x128xf32>
    %cst_11 = arith.constant 0.000000e+00 : f32
    %15 = vector.broadcast %cst_11 : f32 to vector<576x128xf32>
    %16 = arith.maximumf %14, %15 : vector<576x128xf32>
    %c0_12 = arith.constant 0 : index
    %c0_13 = arith.constant 0 : index
    %17 = vector.load %arg6[%c0_12, %c0_13] : memref<576x1xf32, #tpu.memory_space<vmem>>, vector<576x1xf32>
    %18 = vector.broadcast %17 : vector<576x1xf32> to vector<576x128xf32>
    %19 = arith.mulf %16, %18 : vector<576x128xf32>
    %cst_14 = arith.constant dense<0.000000e+00> : vector<128xf32>
    %20 = vector.multi_reduction <add>, %19, %cst_14 [0] : vector<576x128xf32> to vector<128xf32>
    %21 = vector.shape_cast %20 : vector<128xf32> to vector<1x128xf32>
    %c0_15 = arith.constant 0 : index
    %c0_16 = arith.constant 0 : index
    %22 = vector.load %arg7[%c0_15, %c0_16] : memref<1x1xf32, #tpu.memory_space<vmem>>, vector<1x1xf32>
    %23 = vector.broadcast %22 : vector<1x1xf32> to vector<1x128xf32>
    %24 = arith.addf %21, %23 : vector<1x128xf32>
    %cst_17 = arith.constant 0.000000e+00 : f32
    %25 = vector.broadcast %cst_17 : f32 to vector<1x128xf32>
    %26 = arith.subf %25, %24 : vector<1x128xf32>
    %27 = math.exp %26 : vector<1x128xf32>
    %cst_18 = arith.constant 1.000000e+00 : f32
    %28 = vector.broadcast %cst_18 : f32 to vector<1x128xf32>
    %29 = arith.addf %28, %27 : vector<1x128xf32>
    %30 = tpu.reciprocal %29 {approx = true} : vector<1x128xf32> -> vector<1x128xf32>
    %c0_19 = arith.constant 0 : index
    %c0_20 = arith.constant 0 : index
    %31 = vector.load %arg8[%c0_19, %c0_20] : memref<1x128xf32, #tpu.memory_space<vmem>>, vector<1x128xf32>
    tpu.vector_store %arg8[%c0_19, %c0_20], %30 {strides = array<i32>} : memref<1x128xf32, #tpu.memory_space<vmem>>, vector<1x128xf32>,
    return
  }
  func.func @transform_0(%arg0: i32) -> (i32, i32) {
    %c0_i32 = arith.constant 0 : i32
    %c0_i32_0 = arith.constant 0 : i32
    return %c0_i32, %arg0 : i32, i32
  }
  func.func @transform_1(%arg0: i32) -> (i32, i32) {
    %c0_i32 = arith.constant 0 : i32
    %c0_i32_0 = arith.constant 0 : i32
    %c0_i32_1 = arith.constant 0 : i32
    return %c0_i32, %c0_i32_0 : i32, i32
  }
  func.func @transform_2(%arg0: i32) -> (i32, i32) {
    %c0_i32 = arith.constant 0 : i32
    %c0_i32_0 = arith.constant 0 : i32
    %c0_i32_1 = arith.constant 0 : i32
    return %c0_i32, %c0_i32_0 : i32, i32
  }
  func.func @transform_3(%arg0: i32) -> (i32, i32) {
    %c0_i32 = arith.constant 0 : i32
    %c0_i32_0 = arith.constant 0 : i32
    %c0_i32_1 = arith.constant 0 : i32
    return %c0_i32, %c0_i32_0 : i32, i32
  }
  func.func @transform_4(%arg0: i32) -> (i32, i32) {
    %c0_i32 = arith.constant 0 : i32
    %c0_i32_0 = arith.constant 0 : i32
    %c0_i32_1 = arith.constant 0 : i32
    return %c0_i32, %c0_i32_0 : i32, i32
  }
  func.func @transform_5(%arg0: i32) -> (i32, i32) {
    %c0_i32 = arith.constant 0 : i32
    %c0_i32_0 = arith.constant 0 : i32
    %c0_i32_1 = arith.constant 0 : i32
    return %c0_i32, %c0_i32_0 : i32, i32
  }
  func.func @transform_6(%arg0: i32) -> (i32, i32) {
    %c0_i32 = arith.constant 0 : i32
    %c0_i32_0 = arith.constant 0 : i32
    %c0_i32_1 = arith.constant 0 : i32
    return %c0_i32, %c0_i32_0 : i32, i32
  }
  func.func @transform_7(%arg0: i32) -> (i32, i32) {
    %c0_i32 = arith.constant 0 : i32
    %c0_i32_0 = arith.constant 0 : i32
    return %c0_i32, %arg0 : i32, i32
  }
}

</mosaic_0001>

<llo_original>
// kernel: tpu_custom_call.1
$region0: #{tpu_custom_call.1}
  #allocation0 [shape = 'u32[]', space=smem, size = 0x4, offset = 0x4, fixed_abs, tag = 'smem constant byte address 0x4 - core index']
  #allocation1 [shape = 'u32[144,128]{1,0:T(1,128)}', space=vmem, size = 0x12000, scoped, tag = 'internal scratch']
  #allocation2 [shape = 'f32[1,1]{1,0:T(1,128)S(1)}', space=vmem, size = 0x200, scoped, tag = 'scoped memory for tpu_custom_call.1']
  %s0 = inlined_call_operand.vmem [shape: f32[9,128], index: 0, kind: input, shape index: {}]
  %s1 = inlined_call_operand.vmem [shape: bf16[288,9], index: 1, kind: input, shape index: {}]
  %s2 = inlined_call_operand.vmem [shape: f32[288,1], index: 2, kind: input, shape index: {}]
  %s3 = inlined_call_operand.vmem [shape: bf16[576,288], index: 3, kind: input, shape index: {}]
  %s4 = inlined_call_operand.vmem [shape: f32[576,1], index: 4, kind: input, shape index: {}]
  %s5 = inlined_call_operand.vmem [shape: f32[576,1], index: 5, kind: input, shape index: {}]
  %s6 = inlined_call_operand.<no memory space> [shape: f32[1,1], index: 6, kind: input, shape index: {}]
  %s7 = inlined_call_operand.hbm [shape: f32[1,128], index: 7, kind: output, shape index: {}]
  %s8 = sld [smem:[#allocation0]]
  $region38: #{tpu_custom_call.1} parent=0
    _
  %s10 = ssub.s32 1, %s8
  %s11 = scalar_select 0, %s10, %s8
  %v12 = vstv %s6
  %13 = vst [vmem:[#allocation2] sm:$0x1] %v12
  $region1: #{tpu_custom_call.1} parent=0
    #allocation3 [shape = 'u8[512]{0}', space=vmem, size = 0x400, scoped, tag = 'output window, operand 0, single buffered']
    #allocation4 [shape = 's32[1]{0}', space=sflag, size = 0x4, scoped, tag = 'scoped memory for tpu_custom_call.1']
    %14 = vsyncpa [#allocation4], 0
    // Predicated region
    $region2: #{tpu_custom_call.1} parent=1 // pred_check
      _
    $region3: #{tpu_custom_call.1} parent=1 // pred_check_branch
      %16 = sbr.rel (0) target = $region5
    $region4: #{tpu_custom_call.1} parent=1 // pred_region
      _
    $region5: #{tpu_custom_call.1} parent=1 // pred_fallthru
      _
    // Predicated region
    $region6: #{tpu_custom_call.1} parent=1 // pred_check
      _
    $region7: #{tpu_custom_call.1} parent=1 // pred_check_branch
      %18 = sbr.rel (0) target = $region9
    $region8: #{tpu_custom_call.1} parent=1 // pred_region
      _
    $region9: #{tpu_custom_call.1} parent=1 // pred_fallthru
      _
    // Predicated region
    $region10: #{tpu_custom_call.1} parent=1 // pred_check
      _
    $region11: #{tpu_custom_call.1} parent=1 // pred_check_branch
      %20 = sbr.rel (0) target = $region13
    $region12: #{tpu_custom_call.1} parent=1 // pred_region
      _
    $region13: #{tpu_custom_call.1} parent=1 // pred_fallthru
      _
    // Predicated region
    $region14: #{tpu_custom_call.1} parent=1 // pred_check
      _
    $region15: #{tpu_custom_call.1} parent=1 // pred_check_branch
      %22 = sbr.rel (0) target = $region17
    $region16: #{tpu_custom_call.1} parent=1 // pred_region
      _
    $region17: #{tpu_custom_call.1} parent=1 // pred_fallthru
      _
    // Predicated region
    $region18: #{tpu_custom_call.1} parent=1 // pred_check
      _
    $region19: #{tpu_custom_call.1} parent=1 // pred_check_branch
      %24 = sbr.rel (0) target = $region21
    $region20: #{tpu_custom_call.1} parent=1 // pred_region
      _
    $region21: #{tpu_custom_call.1} parent=1 // pred_fallthru
      _
    // Predicated region
    $region22: #{tpu_custom_call.1} parent=1 // pred_check
      _
    $region23: #{tpu_custom_call.1} parent=1 // pred_check_branch
      %26 = sbr.rel (0) target = $region25
    $region24: #{tpu_custom_call.1} parent=1 // pred_region
      _
    $region25: #{tpu_custom_call.1} parent=1 // pred_fallthru
      _
    // Predicated region
    $region26: #{tpu_custom_call.1} parent=1 // pred_check
      _
    $region27: #{tpu_custom_call.1} parent=1 // pred_check_branch
      %28 = sbr.rel (0) target = $region29
    $region28: #{tpu_custom_call.1} parent=1 // pred_region
      _
    $region29: #{tpu_custom_call.1} parent=1 // pred_fallthru
      _
    %v30 = vld [vmem:[%s0] sm:$0xff]
    %v31 = vld [vmem:[%s0 + $0x8] sm:$0x1]
    %v32 = vpack.c.bf16 %v31, %v30
    %v33 = vld [vmem:[%s1] sm:$0xf]
    %v34 = vld [vmem:[%s1 + $0x4] sm:$0xf]
    %v35 = vld [vmem:[%s1 + $0x8] sm:$0xf]
    %v36 = vld [vmem:[%s1 + $0xc] sm:$0xf]
    %v37 = vld [vmem:[%s1 + $0x10] sm:$0xf]
    %v38 = vld [vmem:[%s1 + $0x14] sm:$0xf]
    %v39 = vld [vmem:[%s1 + $0x18] sm:$0xf]
    %v40 = vld [vmem:[%s1 + $0x1c] sm:$0xf]
    %v41 = vld [vmem:[%s1 + $0x20] sm:$0xf]
    %v42 = vld [vmem:[%s1 + $0x24] sm:$0xf]
    %v43 = vld [vmem:[%s1 + $0x28] sm:$0xf]
    %v44 = vld [vmem:[%s1 + $0x2c] sm:$0xf]
    %v45 = vld [vmem:[%s1 + $0x30] sm:$0xf]
    %v46 = vld [vmem:[%s1 + $0x34] sm:$0xf]
    %v47 = vld [vmem:[%s1 + $0x38] sm:$0xf]
    %v48 = vld [vmem:[%s1 + $0x3c] sm:$0xf]
    %v49 = vld [vmem:[%s1 + $0x40] sm:$0xf]
    %v50 = vld [vmem:[%s1 + $0x44] sm:$0xf]
    %v51 = vld [vmem:[%s1 + $0x48] sm:$0xf]
    %v52 = vld [vmem:[%s1 + $0x4c] sm:$0xf]
    %v53 = vld [vmem:[%s1 + $0x50] sm:$0xf]
    %v54 = vld [vmem:[%s1 + $0x54] sm:$0xf]
    %v55 = vld [vmem:[%s1 + $0x58] sm:$0xf]
    %v56 = vld [vmem:[%s1 + $0x5c] sm:$0xf]
    %v57 = vld [vmem:[%s1 + $0x60] sm:$0xf]
    %v58 = vld [vmem:[%s1 + $0x64] sm:$0xf]
    %v59 = vld [vmem:[%s1 + $0x68] sm:$0xf]
    %v60 = vld [vmem:[%s1 + $0x6c] sm:$0xf]
    %v61 = vld [vmem:[%s1 + $0x70] sm:$0xf]
    %v62 = vld [vmem:[%s1 + $0x74] sm:$0xf]
    %v63 = vld [vmem:[%s1 + $0x78] sm:$0xf]
    %v64 = vld [vmem:[%s1 + $0x7c] sm:$0xf]
    %v65 = vld [vmem:[%s1 + $0x80] sm:$0xf]
    %v66 = vld [vmem:[%s1 + $0x84] sm:$0xf]
    %v67 = vld [vmem:[%s1 + $0x88] sm:$0xf]
    %v68 = vld [vmem:[%s1 + $0x8c] sm:$0xf]
    %v69 = vld [vmem:[%s2] sm:$0xff]
    %v70 = vld [vmem:[%s2 + $0x8] sm:$0xff]
    %v71 = vld [vmem:[%s2 + $0x10] sm:$0xff]
    %v72 = vld [vmem:[%s2 + $0x18] sm:$0xff]
    %v73 = vld [vmem:[%s2 + $0x20] sm:$0xff]
    %v74 = vld [vmem:[%s2 + $0x28] sm:$0xff]
    %v75 = vld [vmem:[%s2 + $0x30] sm:$0xff]
    %v76 = vld [vmem:[%s2 + $0x38] sm:$0xff]
    %v77 = vld [vmem:[%s2 + $0x40] sm:$0xff]
    %v78 = vld [vmem:[%s2 + $0x48] sm:$0xff]
    %v79 = vld [vmem:[%s2 + $0x50] sm:$0xff]
    %v80 = vld [vmem:[%s2 + $0x58] sm:$0xff]
    %v81 = vld [vmem:[%s2 + $0x60] sm:$0xff]
    %v82 = vld [vmem:[%s2 + $0x68] sm:$0xff]
    %v83 = vld [vmem:[%s2 + $0x70] sm:$0xff]
    %v84 = vld [vmem:[%s2 + $0x78] sm:$0xff]
    %v85 = vld [vmem:[%s2 + $0x80] sm:$0xff]
    %v86 = vld [vmem:[%s2 + $0x88] sm:$0xff]
    %v87 = vld [vmem:[%s2 + $0x90] sm:$0xff]
    %v88 = vld [vmem:[%s2 + $0x98] sm:$0xff]
    %v89 = vld [vmem:[%s2 + $0xa0] sm:$0xff]
    %v90 = vld [vmem:[%s2 + $0xa8] sm:$0xff]
    %v91 = vld [vmem:[%s2 + $0xb0] sm:$0xff]
    %v92 = vld [vmem:[%s2 + $0xb8] sm:$0xff]
    %v93 = vld [vmem:[%s2 + $0xc0] sm:$0xff]
    %v94 = vld [vmem:[%s2 + $0xc8] sm:$0xff]
    %v95 = vld [vmem:[%s2 + $0xd0] sm:$0xff]
    %v96 = vld [vmem:[%s2 + $0xd8] sm:$0xff]
    %v97 = vld [vmem:[%s2 + $0xe0] sm:$0xff]
    %v98 = vld [vmem:[%s2 + $0xe8] sm:$0xff]
    %v99 = vld [vmem:[%s2 + $0xf0] sm:$0xff]
    %v100 = vld [vmem:[%s2 + $0xf8] sm:$0xff]
    %v101 = vld [vmem:[%s2 + $0x100] sm:$0xff]
    %v102 = vld [vmem:[%s2 + $0x108] sm:$0xff]
    %v103 = vld [vmem:[%s2 + $0x110] sm:$0xff]
    %v104 = vld [vmem:[%s2 + $0x118] sm:$0xff]
    %106 = vset.pattern.permute.xlu0 0
    %107 = vperm.xlu0 %106, %v69
    %v108 = vpop.permute.xlu0 %107
    %111 = vset.pattern.permute.xlu0 0
    %112 = vperm.xlu0 %111, %v70
    %v113 = vpop.permute.xlu0 %112
    %116 = vset.pattern.permute.xlu0 0
    %117 = vperm.xlu0 %116, %v71
    %v118 = vpop.permute.xlu0 %117
    %121 = vset.pattern.permute.xlu0 0
    %122 = vperm.xlu0 %121, %v72
    %v123 = vpop.permute.xlu0 %122
    %126 = vset.pattern.permute.xlu0 0
    %127 = vperm.xlu0 %126, %v73
    %v128 = vpop.permute.xlu0 %127
    %131 = vset.pattern.permute.xlu0 0
    %132 = vperm.xlu0 %131, %v74
    %v133 = vpop.permute.xlu0 %132
    %136 = vset.pattern.permute.xlu0 0
    %137 = vperm.xlu0 %136, %v75
    %v138 = vpop.permute.xlu0 %137
    %141 = vset.pattern.permute.xlu0 0
    %142 = vperm.xlu0 %141, %v76
    %v143 = vpop.permute.xlu0 %142
    %146 = vset.pattern.permute.xlu0 0
    %147 = vperm.xlu0 %146, %v77
    %v148 = vpop.permute.xlu0 %147
    %151 = vset.pattern.permute.xlu0 0
    %152 = vperm.xlu0 %151, %v78
    %v153 = vpop.permute.xlu0 %152
    %156 = vset.pattern.permute.xlu0 0
    %157 = vperm.xlu0 %156, %v79
    %v158 = vpop.permute.xlu0 %157
    %161 = vset.pattern.permute.xlu0 0
    %162 = vperm.xlu0 %161, %v80
    %v163 = vpop.permute.xlu0 %162
    %166 = vset.pattern.permute.xlu0 0
    %167 = vperm.xlu0 %166, %v81
    %v168 = vpop.permute.xlu0 %167
    %171 = vset.pattern.permute.xlu0 0
    %172 = vperm.xlu0 %171, %v82
    %v173 = vpop.permute.xlu0 %172
    %176 = vset.pattern.permute.xlu0 0
    %177 = vperm.xlu0 %176, %v83
    %v178 = vpop.permute.xlu0 %177
    %181 = vset.pattern.permute.xlu0 0
    %182 = vperm.xlu0 %181, %v84
    %v183 = vpop.permute.xlu0 %182
    %186 = vset.pattern.permute.xlu0 0
    %187 = vperm.xlu0 %186, %v85
    %v188 = vpop.permute.xlu0 %187
    %191 = vset.pattern.permute.xlu0 0
    %192 = vperm.xlu0 %191, %v86
    %v193 = vpop.permute.xlu0 %192
    %196 = vset.pattern.permute.xlu0 0
    %197 = vperm.xlu0 %196, %v87
    %v198 = vpop.permute.xlu0 %197
    %201 = vset.pattern.permute.xlu0 0
    %202 = vperm.xlu0 %201, %v88
    %v203 = vpop.permute.xlu0 %202
    %206 = vset.pattern.permute.xlu0 0
    %207 = vperm.xlu0 %206, %v89
    %v208 = vpop.permute.xlu0 %207
    %211 = vset.pattern.permute.xlu0 0
    %212 = vperm.xlu0 %211, %v90
    %v213 = vpop.permute.xlu0 %212
    %216 = vset.pattern.permute.xlu0 0
    %217 = vperm.xlu0 %216, %v91
    %v218 = vpop.permute.xlu0 %217
    %221 = vset.pattern.permute.xlu0 0
    %222 = vperm.xlu0 %221, %v92
    %v223 = vpop.permute.xlu0 %222
    %226 = vset.pattern.permute.xlu0 0
    %227 = vperm.xlu0 %226, %v93
    %v228 = vpop.permute.xlu0 %227
    %231 = vset.pattern.permute.xlu0 0
    %232 = vperm.xlu0 %231, %v94
    %v233 = vpop.permute.xlu0 %232
    %236 = vset.pattern.permute.xlu0 0
    %237 = vperm.xlu0 %236, %v95
    %v238 = vpop.permute.xlu0 %237
    %241 = vset.pattern.permute.xlu0 0
    %242 = vperm.xlu0 %241, %v96
    %v243 = vpop.permute.xlu0 %242
    %246 = vset.pattern.permute.xlu0 0
    %247 = vperm.xlu0 %246, %v97
    %v248 = vpop.permute.xlu0 %247
    %251 = vset.pattern.permute.xlu0 0
    %252 = vperm.xlu0 %251, %v98
    %v253 = vpop.permute.xlu0 %252
    %256 = vset.pattern.permute.xlu0 0
    %257 = vperm.xlu0 %256, %v99
    %v258 = vpop.permute.xlu0 %257
    %261 = vset.pattern.permute.xlu0 0
    %262 = vperm.xlu0 %261, %v100
    %v263 = vpop.permute.xlu0 %262
    %266 = vset.pattern.permute.xlu0 0
    %267 = vperm.xlu0 %266, %v101
    %v268 = vpop.permute.xlu0 %267
    %271 = vset.pattern.permute.xlu0 0
    %272 = vperm.xlu0 %271, %v102
    %v273 = vpop.permute.xlu0 %272
    %276 = vset.pattern.permute.xlu0 0
    %277 = vperm.xlu0 %276, %v103
    %v278 = vpop.permute.xlu0 %277
    %281 = vset.pattern.permute.xlu0 0
    %282 = vperm.xlu0 %281, %v104
    %v283 = vpop.permute.xlu0 %282
    %v321 = vunpack.c.l.b16 %v33
    %v322 = vunpack.c.l.b16 %v34
    %v323 = vunpack.c.l.b16 %v35
    %v324 = vunpack.c.l.b16 %v36
    %v325 = vunpack.c.l.b16 %v37
    %v326 = vunpack.c.l.b16 %v38
    %v327 = vunpack.c.l.b16 %v39
    %v328 = vunpack.c.l.b16 %v40
    %v329 = vunpack.c.l.b16 %v41
    %v330 = vunpack.c.l.b16 %v42
    %v331 = vunpack.c.l.b16 %v43
    %v332 = vunpack.c.l.b16 %v44
    %v333 = vunpack.c.l.b16 %v45
    %v334 = vunpack.c.l.b16 %v46
    %v335 = vunpack.c.l.b16 %v47
    %v336 = vunpack.c.l.b16 %v48
    %v337 = vunpack.c.l.b16 %v49
    %v338 = vunpack.c.l.b16 %v50
    %v339 = vunpack.c.l.b16 %v51
    %v340 = vunpack.c.l.b16 %v52
    %v341 = vunpack.c.l.b16 %v53
    %v342 = vunpack.c.l.b16 %v54
    %v343 = vunpack.c.l.b16 %v55
    %v344 = vunpack.c.l.b16 %v56
    %v345 = vunpack.c.l.b16 %v57
    %v346 = vunpack.c.l.b16 %v58
    %v347 = vunpack.c.l.b16 %v59
    %v348 = vunpack.c.l.b16 %v60
    %v349 = vunpack.c.l.b16 %v61
    %v350 = vunpack.c.l.b16 %v62
    %v351 = vunpack.c.l.b16 %v63
    %v352 = vunpack.c.l.b16 %v64
    %v353 = vunpack.c.l.b16 %v65
    %v354 = vunpack.c.l.b16 %v66
    %v355 = vunpack.c.l.b16 %v67
    %v356 = vunpack.c.l.b16 %v68
    %v357 = vpack.c.b16 %v322, %v321
    %v358 = vpack.c.b16 %v324, %v323
    %v359 = vpack.c.b16 %v326, %v325
    %v360 = vpack.c.b16 %v328, %v327
    %v361 = vpack.c.b16 %v330, %v329
    %v362 = vpack.c.b16 %v332, %v331
    %v363 = vpack.c.b16 %v334, %v333
    %v364 = vpack.c.b16 %v336, %v335
    %v365 = vpack.c.b16 %v338, %v337
    %v366 = vpack.c.b16 %v340, %v339
    %v367 = vpack.c.b16 %v342, %v341
    %v368 = vpack.c.b16 %v344, %v343
    %v369 = vpack.c.b16 %v346, %v345
    %v370 = vpack.c.b16 %v348, %v347
    %v371 = vpack.c.b16 %v350, %v349
    %v372 = vpack.c.b16 %v352, %v351
    %v373 = vpack.c.b16 %v354, %v353
    %v374 = vpack.c.b16 %v356, %v355
    %vm375 = vcmask 72704
    %v377 = vsel %vm375, %v357, 0
    %v380 = vsel %vm375, %v358, 0
    %v383 = vsel %vm375, %v359, 0
    %v386 = vsel %vm375, %v360, 0
    %v389 = vsel %vm375, %v361, 0
    %v392 = vsel %vm375, %v362, 0
    %v395 = vsel %vm375, %v363, 0
    %v398 = vsel %vm375, %v364, 0
    %v401 = vsel %vm375, %v365, 0
    %v404 = vsel %vm375, %v366, 0
    %v407 = vsel %vm375, %v367, 0
    %v410 = vsel %vm375, %v368, 0
    %v413 = vsel %vm375, %v369, 0
    %v416 = vsel %vm375, %v370, 0
    %v419 = vsel %vm375, %v371, 0
    %v422 = vsel %vm375, %v372, 0
    %v425 = vsel %vm375, %v373, 0
    %v428 = vsel %vm375, %v374, 0
    %vm430 = vcmask 1043456
    %vm431 = vcmask 1044480
    %v432 = vsel %vm430, 4294967295, 65535
    %v433 = vsel %vm431, %v432, 0
    %v435 = vand.u32 %v32, %v433
    %437 = vmatprep.subr.bf16.mxu0 0
    %438 = vmatpush1.bf16.msra.mxu0 0
    %439 = vmatprep.subr.bf16.mxu0 0
    %440 = vmatpush1.bf16.msra.mxu0 0
    %441 = vmatprep.subr.bf16.mxu0 0
    %442 = vmatpush1.bf16.msra.mxu0 0
    %443 = vmatprep.subr.bf16.mxu0 0
    %444 = vmatpush1.bf16.msra.mxu0 0
    %445 = vmatprep.subr.bf16.mxu0 0
    %446 = vmatpush1.bf16.msra.mxu0 0
    %447 = vmatprep.subr.bf16.mxu0 0
    %448 = vmatpush1.bf16.msra.mxu0 0
    %449 = vmatprep.subr.bf16.mxu0 0
    %450 = vmatpush1.bf16.msra.mxu0 0
    %451 = vmatprep.subr.bf16.mxu0 0
    %452 = vmatpush1.bf16.msra.mxu0 %v435
    %453 = vmatprep.subr.bf16.mxu0 0
    %454 = vmatpush2.bf16.msra.mxu0 0
    %455 = vmatprep.subr.bf16.mxu0 0
    %456 = vmatpush2.bf16.msra.mxu0 0
    %457 = vmatprep.subr.bf16.mxu0 0
    %458 = vmatpush2.bf16.msra.mxu0 0
    %459 = vmatprep.subr.bf16.mxu0 0
    %460 = vmatpush2.bf16.msra.mxu0 0
    %461 = vmatprep.subr.bf16.mxu0 0
    %462 = vmatpush2.bf16.msra.mxu0 0
    %463 = vmatprep.subr.bf16.mxu0 0
    %464 = vmatpush2.bf16.msra.mxu0 0
    %465 = vmatprep.subr.bf16.mxu0 0
    %466 = vmatpush2.bf16.msra.mxu0 0
    %467 = vmatprep.subr.bf16.mxu0 0
    %468 = vmatpush2.bf16.msra.mxu0 0
    %469 = vmatprep.mubr.bf16.mxu0 0
    %470 = vmatmul.mubr.bf16.gmra.mxu0 %v377
    %v471 = vpop.f32.mrf.mxu0
    %v472 = vadd.f32 %v108, %v471
    %v473 = vpop.f32.mrf.mxu0
    %v474 = vpop.f32.mrf.mxu0
    %v475 = vadd.f32 %v113, %v474
    %v476 = vpop.f32.mrf.mxu0
    %477 = vmatprep.mubr.bf16.mxu0 0
    %478 = vmatmul.mubr.bf16.gmra.mxu0 %v380
    %v479 = vpop.f32.mrf.mxu0
    %v480 = vadd.f32 %v118, %v479
    %v481 = vpop.f32.mrf.mxu0
    %v482 = vpop.f32.mrf.mxu0
    %v483 = vadd.f32 %v123, %v482
    %v484 = vpop.f32.mrf.mxu0
    %485 = vmatprep.mubr.bf16.mxu0 0
    %486 = vmatmul.mubr.bf16.gmra.mxu0 %v383
    %v487 = vpop.f32.mrf.mxu0
    %v488 = vadd.f32 %v128, %v487
    %v489 = vpop.f32.mrf.mxu0
    %v490 = vpop.f32.mrf.mxu0
    %v491 = vadd.f32 %v133, %v490
    %v492 = vpop.f32.mrf.mxu0
    %493 = vmatprep.mubr.bf16.mxu0 0
    %494 = vmatmul.mubr.bf16.gmra.mxu0 %v386
    %v495 = vpop.f32.mrf.mxu0
    %v496 = vadd.f32 %v138, %v495
    %v497 = vpop.f32.mrf.mxu0
    %v498 = vpop.f32.mrf.mxu0
    %v499 = vadd.f32 %v143, %v498
    %v500 = vpop.f32.mrf.mxu0
    %501 = vmatprep.mubr.bf16.mxu0 0
    %502 = vmatmul.mubr.bf16.gmra.mxu0 %v389
    %v503 = vpop.f32.mrf.mxu0
    %v504 = vadd.f32 %v148, %v503
    %v505 = vpop.f32.mrf.mxu0
    %v506 = vpop.f32.mrf.mxu0
    %v507 = vadd.f32 %v153, %v506
    %v508 = vpop.f32.mrf.mxu0
    %509 = vmatprep.mubr.bf16.mxu0 0
    %510 = vmatmul.mubr.bf16.gmra.mxu0 %v392
    %v511 = vpop.f32.mrf.mxu0
    %v512 = vadd.f32 %v158, %v511
    %v513 = vpop.f32.mrf.mxu0
    %v514 = vpop.f32.mrf.mxu0
    %v515 = vadd.f32 %v163, %v514
    %v516 = vpop.f32.mrf.mxu0
    %517 = vmatprep.mubr.bf16.mxu0 0
    %518 = vmatmul.mubr.bf16.gmra.mxu0 %v395
    %v519 = vpop.f32.mrf.mxu0
    %v520 = vadd.f32 %v168, %v519
    %v521 = vpop.f32.mrf.mxu0
    %v522 = vpop.f32.mrf.mxu0
    %v523 = vadd.f32 %v173, %v522
    %v524 = vpop.f32.mrf.mxu0
    %525 = vmatprep.mubr.bf16.mxu0 0
    %526 = vmatmul.mubr.bf16.gmra.mxu0 %v398
    %v527 = vpop.f32.mrf.mxu0
    %v528 = vadd.f32 %v178, %v527
    %v529 = vpop.f32.mrf.mxu0
    %v530 = vpop.f32.mrf.mxu0
    %v531 = vadd.f32 %v183, %v530
    %v532 = vpop.f32.mrf.mxu0
    %533 = vmatprep.mubr.bf16.mxu0 0
    %534 = vmatmul.mubr.bf16.gmra.mxu0 %v401
    %v535 = vpop.f32.mrf.mxu0
    %v536 = vadd.f32 %v188, %v535
    %v537 = vpop.f32.mrf.mxu0
    %v538 = vpop.f32.mrf.mxu0
    %v539 = vadd.f32 %v193, %v538
    %v540 = vpop.f32.mrf.mxu0
    %541 = vmatprep.mubr.bf16.mxu0 0
    %542 = vmatmul.mubr.bf16.gmra.mxu0 %v404
    %v543 = vpop.f32.mrf.mxu0
    %v544 = vadd.f32 %v198, %v543
    %v545 = vpop.f32.mrf.mxu0
    %v546 = vpop.f32.mrf.mxu0
    %v547 = vadd.f32 %v203, %v546
    %v548 = vpop.f32.mrf.mxu0
    %549 = vmatprep.mubr.bf16.mxu0 0
    %550 = vmatmul.mubr.bf16.gmra.mxu0 %v407
    %v551 = vpop.f32.mrf.mxu0
    %v552 = vadd.f32 %v208, %v551
    %v553 = vpop.f32.mrf.mxu0
    %v554 = vpop.f32.mrf.mxu0
    %v555 = vadd.f32 %v213, %v554
    %v556 = vpop.f32.mrf.mxu0
    %557 = vmatprep.mubr.bf16.mxu0 0
    %558 = vmatmul.mubr.bf16.gmra.mxu0 %v410
    %v559 = vpop.f32.mrf.mxu0
    %v560 = vadd.f32 %v218, %v559
    %v561 = vpop.f32.mrf.mxu0
    %v562 = vpop.f32.mrf.mxu0
    %v563 = vadd.f32 %v223, %v562
    %v564 = vpop.f32.mrf.mxu0
    %565 = vmatprep.mubr.bf16.mxu0 0
    %566 = vmatmul.mubr.bf16.gmra.mxu0 %v413
    %v567 = vpop.f32.mrf.mxu0
    %v568 = vadd.f32 %v228, %v567
    %v569 = vpop.f32.mrf.mxu0
    %v570 = vpop.f32.mrf.mxu0
    %v571 = vadd.f32 %v233, %v570
    %v572 = vpop.f32.mrf.mxu0
    %573 = vmatprep.mubr.bf16.mxu0 0
    %574 = vmatmul.mubr.bf16.gmra.mxu0 %v416
    %v575 = vpop.f32.mrf.mxu0
    %v576 = vadd.f32 %v238, %v575
    %v577 = vpop.f32.mrf.mxu0
    %v578 = vpop.f32.mrf.mxu0
    %v579 = vadd.f32 %v243, %v578
    %v580 = vpop.f32.mrf.mxu0
    %581 = vmatprep.mubr.bf16.mxu0 0
    %582 = vmatmul.mubr.bf16.gmra.mxu0 %v419
    %v583 = vpop.f32.mrf.mxu0
    %v584 = vadd.f32 %v248, %v583
    %v585 = vpop.f32.mrf.mxu0
    %v586 = vpop.f32.mrf.mxu0
    %v587 = vadd.f32 %v253, %v586
    %v588 = vpop.f32.mrf.mxu0
    %589 = vmatprep.mubr.bf16.mxu0 0
    %590 = vmatmul.mubr.bf16.gmra.mxu0 %v422
    %v591 = vpop.f32.mrf.mxu0
    %v592 = vadd.f32 %v258, %v591
    %v593 = vpop.f32.mrf.mxu0
    %v594 = vpop.f32.mrf.mxu0
    %v595 = vadd.f32 %v263, %v594
    %v596 = vpop.f32.mrf.mxu0
    %597 = vmatprep.mubr.bf16.mxu0 0
    %598 = vmatmul.mubr.bf16.gmra.mxu0 %v425
    %v599 = vpop.f32.mrf.mxu0
    %v600 = vadd.f32 %v268, %v599
    %v601 = vpop.f32.mrf.mxu0
    %v602 = vpop.f32.mrf.mxu0
    %v603 = vadd.f32 %v273, %v602
    %v604 = vpop.f32.mrf.mxu0
    %605 = vmatprep.mubr.bf16.mxu0 0
    %606 = vmatmul.mubr.bf16.gmra.mxu0 %v428
    %v607 = vpop.f32.mrf.mxu0
    %v608 = vadd.f32 %v278, %v607
    %v609 = vpop.f32.mrf.mxu0
    %v610 = vpop.f32.mrf.mxu0
    %v611 = vadd.f32 %v283, %v610
    %v612 = vpop.f32.mrf.mxu0
    %613 = vdwg.mxu0
    %v614 = vmax.f32 %v472, 0.0
    %v615 = vmax.f32 %v475, 0.0
    %v616 = vmax.f32 %v480, 0.0
    %v617 = vmax.f32 %v483, 0.0
    %v618 = vmax.f32 %v488, 0.0
    %v619 = vmax.f32 %v491, 0.0
    %v620 = vmax.f32 %v496, 0.0
    %v621 = vmax.f32 %v499, 0.0
    %v622 = vmax.f32 %v504, 0.0
    %v623 = vmax.f32 %v507, 0.0
    %v624 = vmax.f32 %v512, 0.0
    %v625 = vmax.f32 %v515, 0.0
    %v626 = vmax.f32 %v520, 0.0
    %v627 = vmax.f32 %v523, 0.0
    %v628 = vmax.f32 %v528, 0.0
    %v629 = vmax.f32 %v531, 0.0
    %v630 = vmax.f32 %v536, 0.0
    %v631 = vmax.f32 %v539, 0.0
    %v632 = vmax.f32 %v544, 0.0
    %v633 = vmax.f32 %v547, 0.0
    %v634 = vmax.f32 %v552, 0.0
    %v635 = vmax.f32 %v555, 0.0
    %v636 = vmax.f32 %v560, 0.0
    %v637 = vmax.f32 %v563, 0.0
    %v638 = vmax.f32 %v568, 0.0
    %v639 = vmax.f32 %v571, 0.0
    %v640 = vmax.f32 %v576, 0.0
    %v641 = vmax.f32 %v579, 0.0
    %v642 = vmax.f32 %v584, 0.0
    %v643 = vmax.f32 %v587, 0.0
    %v644 = vmax.f32 %v592, 0.0
    %v645 = vmax.f32 %v595, 0.0
    %v646 = vmax.f32 %v600, 0.0
    %v647 = vmax.f32 %v603, 0.0
    %v648 = vmax.f32 %v608, 0.0
    %v649 = vmax.f32 %v611, 0.0
    %v650 = vld [vmem:[%s3] sm:$0xff]
    %v651 = vld [vmem:[%s3 + $0x8] sm:$0xf]
    %v652 = vld [vmem:[%s3 + $0xc] sm:$0xff]
    %v653 = vld [vmem:[%s3 + $0x14] sm:$0xf]
    %v654 = vld [vmem:[%s3 + $0x18] sm:$0xff]
    %v655 = vld [vmem:[%s3 + $0x20] sm:$0xf]
    %v656 = vld [vmem:[%s3 + $0x24] sm:$0xff]
    %v657 = vld [vmem:[%s3 + $0x2c] sm:$0xf]
    %v658 = vld [vmem:[%s3 + $0x30] sm:$0xff]
    %v659 = vld [vmem:[%s3 + $0x38] sm:$0xf]
    %v660 = vld [vmem:[%s3 + $0x3c] sm:$0xff]
    %v661 = vld [vmem:[%s3 + $0x44] sm:$0xf]
    %v662 = vld [vmem:[%s3 + $0x48] sm:$0xff]
    %v663 = vld [vmem:[%s3 + $0x50] sm:$0xf]
    %v664 = vld [vmem:[%s3 + $0x54] sm:$0xff]
    %v665 = vld [vmem:[%s3 + $0x5c] sm:$0xf]
    %v666 = vld [vmem:[%s3 + $0x60] sm:$0xff]
    %v667 = vld [vmem:[%s3 + $0x68] sm:$0xf]
    %v668 = vld [vmem:[%s3 + $0x6c] sm:$0xff]
    %v669 = vld [vmem:[%s3 + $0x74] sm:$0xf]
    %v670 = vld [vmem:[%s3 + $0x78] sm:$0xff]
    %v671 = vld [vmem:[%s3 + $0x80] sm:$0xf]
    %v672 = vld [vmem:[%s3 + $0x84] sm:$0xff]
    %v673 = vld [vmem:[%s3 + $0x8c] sm:$0xf]
    %v674 = vld [vmem:[%s3 + $0x90] sm:$0xff]
    %v675 = vld [vmem:[%s3 + $0x98] sm:$0xf]
    %v676 = vld [vmem:[%s3 + $0x9c] sm:$0xff]
    %v677 = vld [vmem:[%s3 + $0xa4] sm:$0xf]
    %v678 = vld [vmem:[%s3 + $0xa8] sm:$0xff]
    %v679 = vld [vmem:[%s3 + $0xb0] sm:$0xf]
    %v680 = vld [vmem:[%s3 + $0xb4] sm:$0xff]
    %v681 = vld [vmem:[%s3 + $0xbc] sm:$0xf]
    %v682 = vld [vmem:[%s3 + $0xc0] sm:$0xff]
    %v683 = vld [vmem:[%s3 + $0xc8] sm:$0xf]
    %v684 = vld [vmem:[%s3 + $0xcc] sm:$0xff]
    %v685 = vld [vmem:[%s3 + $0xd4] sm:$0xf]
    %v686 = vld [vmem:[%s3 + $0xd8] sm:$0xff]
    %v687 = vld [vmem:[%s3 + $0xe0] sm:$0xf]
    %v688 = vld [vmem:[%s3 + $0xe4] sm:$0xff]
    %v689 = vld [vmem:[%s3 + $0xec] sm:$0xf]
    %v690 = vld [vmem:[%s3 + $0xf0] sm:$0xff]
    %v691 = vld [vmem:[%s3 + $0xf8] sm:$0xf]
    %v692 = vld [vmem:[%s3 + $0xfc] sm:$0xff]
    %v693 = vld [vmem:[%s3 + $0x104] sm:$0xf]
    %v694 = vld [vmem:[%s3 + $0x108] sm:$0xff]
    %v695 = vld [vmem:[%s3 + $0x110] sm:$0xf]
    %v696 = vld [vmem:[%s3 + $0x114] sm:$0xff]
    %v697 = vld [vmem:[%s3 + $0x11c] sm:$0xf]
    %v698 = vld [vmem:[%s3 + $0x120] sm:$0xff]
    %v699 = vld [vmem:[%s3 + $0x128] sm:$0xf]
    %v700 = vld [vmem:[%s3 + $0x12c] sm:$0xff]
    %v701 = vld [vmem:[%s3 + $0x134] sm:$0xf]
    %v702 = vld [vmem:[%s3 + $0x138] sm:$0xff]
    %v703 = vld [vmem:[%s3 + $0x140] sm:$0xf]
    %v704 = vld [vmem:[%s3 + $0x144] sm:$0xff]
    %v705 = vld [vmem:[%s3 + $0x14c] sm:$0xf]
    %v706 = vld [vmem:[%s3 + $0x150] sm:$0xff]
    %v707 = vld [vmem:[%s3 + $0x158] sm:$0xf]
    %v708 = vld [vmem:[%s3 + $0x15c] sm:$0xff]
    %v709 = vld [vmem:[%s3 + $0x164] sm:$0xf]
    %v710 = vld [vmem:[%s3 + $0x168] sm:$0xff]
    %v711 = vld [vmem:[%s3 + $0x170] sm:$0xf]
    %v712 = vld [vmem:[%s3 + $0x174] sm:$0xff]
    %v713 = vld [vmem:[%s3 + $0x17c] sm:$0xf]
    %v714 = vld [vmem:[%s3 + $0x180] sm:$0xff]
    %v715 = vld [vmem:[%s3 + $0x188] sm:$0xf]
    %v716 = vld [vmem:[%s3 + $0x18c] sm:$0xff]
    %v717 = vld [vmem:[%s3 + $0x194] sm:$0xf]
    %v718 = vld [vmem:[%s3 + $0x198] sm:$0xff]
    %v719 = vld [vmem:[%s3 + $0x1a0] sm:$0xf]
    %v720 = vld [vmem:[%s3 + $0x1a4] sm:$0xff]
    %v721 = vld [vmem:[%s3 + $0x1ac] sm:$0xf]
    %v722 = vld [vmem:[%s3 + $0x1b0] sm:$0xff]
    %v723 = vld [vmem:[%s3 + $0x1b8] sm:$0xf]
    %v724 = vld [vmem:[%s3 + $0x1bc] sm:$0xff]
    %v725 = vld [vmem:[%s3 + $0x1c4] sm:$0xf]
    %v726 = vld [vmem:[%s3 + $0x1c8] sm:$0xff]
    %v727 = vld [vmem:[%s3 + $0x1d0] sm:$0xf]
    %v728 = vld [vmem:[%s3 + $0x1d4] sm:$0xff]
    %v729 = vld [vmem:[%s3 + $0x1dc] sm:$0xf]
    %v730 = vld [vmem:[%s3 + $0x1e0] sm:$0xff]
    %v731 = vld [vmem:[%s3 + $0x1e8] sm:$0xf]
    %v732 = vld [vmem:[%s3 + $0x1ec] sm:$0xff]
    %v733 = vld [vmem:[%s3 + $0x1f4] sm:$0xf]
    %v734 = vld [vmem:[%s3 + $0x1f8] sm:$0xff]
    %v735 = vld [vmem:[%s3 + $0x200] sm:$0xf]
    %v736 = vld [vmem:[%s3 + $0x204] sm:$0xff]
    %v737 = vld [vmem:[%s3 + $0x20c] sm:$0xf]
    %v738 = vld [vmem:[%s3 + $0x210] sm:$0xff]
    %v739 = vld [vmem:[%s3 + $0x218] sm:$0xf]
    %v740 = vld [vmem:[%s3 + $0x21c] sm:$0xff]
    %v741 = vld [vmem:[%s3 + $0x224] sm:$0xf]
    %v742 = vld [vmem:[%s3 + $0x228] sm:$0xff]
    %v743 = vld [vmem:[%s3 + $0x230] sm:$0xf]
    %v744 = vld [vmem:[%s3 + $0x234] sm:$0xff]
    %v745 = vld [vmem:[%s3 + $0x23c] sm:$0xf]
    %v746 = vld [vmem:[%s3 + $0x240] sm:$0xff]
    %v747 = vld [vmem:[%s3 + $0x248] sm:$0xf]
    %v748 = vld [vmem:[%s3 + $0x24c] sm:$0xff]
    %v749 = vld [vmem:[%s3 + $0x254] sm:$0xf]
    %v750 = vld [vmem:[%s3 + $0x258] sm:$0xff]
    %v751 = vld [vmem:[%s3 + $0x260] sm:$0xf]
    %v752 = vld [vmem:[%s3 + $0x264] sm:$0xff]
    %v753 = vld [vmem:[%s3 + $0x26c] sm:$0xf]
    %v754 = vld [vmem:[%s3 + $0x270] sm:$0xff]
    %v755 = vld [vmem:[%s3 + $0x278] sm:$0xf]
    %v756 = vld [vmem:[%s3 + $0x27c] sm:$0xff]
    %v757 = vld [vmem:[%s3 + $0x284] sm:$0xf]
    %v758 = vld [vmem:[%s3 + $0x288] sm:$0xff]
    %v759 = vld [vmem:[%s3 + $0x290] sm:$0xf]
    %v760 = vld [vmem:[%s3 + $0x294] sm:$0xff]
    %v761 = vld [vmem:[%s3 + $0x29c] sm:$0xf]
    %v762 = vld [vmem:[%s3 + $0x2a0] sm:$0xff]
    %v763 = vld [vmem:[%s3 + $0x2a8] sm:$0xf]
    %v764 = vld [vmem:[%s3 + $0x2ac] sm:$0xff]
    %v765 = vld [vmem:[%s3 + $0x2b4] sm:$0xf]
    %v766 = vld [vmem:[%s3 + $0x2b8] sm:$0xff]
    %v767 = vld [vmem:[%s3 + $0x2c0] sm:$0xf]
    %v768 = vld [vmem:[%s3 + $0x2c4] sm:$0xff]
    %v769 = vld [vmem:[%s3 + $0x2cc] sm:$0xf]
    %v770 = vld [vmem:[%s3 + $0x2d0] sm:$0xff]
    %v771 = vld [vmem:[%s3 + $0x2d8] sm:$0xf]
    %v772 = vld [vmem:[%s3 + $0x2dc] sm:$0xff]
    %v773 = vld [vmem:[%s3 + $0x2e4] sm:$0xf]
    %v774 = vld [vmem:[%s3 + $0x2e8] sm:$0xff]
    %v775 = vld [vmem:[%s3 + $0x2f0] sm:$0xf]
    %v776 = vld [vmem:[%s3 + $0x2f4] sm:$0xff]
    %v777 = vld [vmem:[%s3 + $0x2fc] sm:$0xf]
    %v778 = vld [vmem:[%s3 + $0x300] sm:$0xff]
    %v779 = vld [vmem:[%s3 + $0x308] sm:$0xf]
    %v780 = vld [vmem:[%s3 + $0x30c] sm:$0xff]
    %v781 = vld [vmem:[%s3 + $0x314] sm:$0xf]
    %v782 = vld [vmem:[%s3 + $0x318] sm:$0xff]
    %v783 = vld [vmem:[%s3 + $0x320] sm:$0xf]
    %v784 = vld [vmem:[%s3 + $0x324] sm:$0xff]
    %v785 = vld [vmem:[%s3 + $0x32c] sm:$0xf]
    %v786 = vld [vmem:[%s3 + $0x330] sm:$0xff]
    %v787 = vld [vmem:[%s3 + $0x338] sm:$0xf]
    %v788 = vld [vmem:[%s3 + $0x33c] sm:$0xff]
    %v789 = vld [vmem:[%s3 + $0x344] sm:$0xf]
    %v790 = vld [vmem:[%s3 + $0x348] sm:$0xff]
    %v791 = vld [vmem:[%s3 + $0x350] sm:$0xf]
    %v792 = vld [vmem:[%s3 + $0x354] sm:$0xff]
    %v793 = vld [vmem:[%s3 + $0x35c] sm:$0xf]
    %v794 = vpack.c.bf16 %v615, %v614
    %v795 = vpack.c.bf16 %v617, %v616
    %v796 = vpack.c.bf16 %v619, %v618
    %v797 = vpack.c.bf16 %v621, %v620
    %v798 = vpack.c.bf16 %v623, %v622
    %v799 = vpack.c.bf16 %v625, %v624
    %v800 = vpack.c.bf16 %v627, %v626
    %v801 = vpack.c.bf16 %v629, %v628
    %v802 = vpack.c.bf16 %v631, %v630
    %v803 = vpack.c.bf16 %v633, %v632
    %v804 = vpack.c.bf16 %v635, %v634
    %v805 = vpack.c.bf16 %v637, %v636
    %v806 = vpack.c.bf16 %v639, %v638
    %v807 = vpack.c.bf16 %v641, %v640
    %v808 = vpack.c.bf16 %v643, %v642
    %v809 = vpack.c.bf16 %v645, %v644
    %v810 = vpack.c.bf16 %v647, %v646
    %v811 = vpack.c.bf16 %v649, %v648
    %v812 = vld [vmem:[%s4] sm:$0xff]
    %v813 = vld [vmem:[%s4 + $0x8] sm:$0xff]
    %v814 = vld [vmem:[%s4 + $0x10] sm:$0xff]
    %v815 = vld [vmem:[%s4 + $0x18] sm:$0xff]
    %v816 = vld [vmem:[%s4 + $0x20] sm:$0xff]
    %v817 = vld [vmem:[%s4 + $0x28] sm:$0xff]
    %v818 = vld [vmem:[%s4 + $0x30] sm:$0xff]
    %v819 = vld [vmem:[%s4 + $0x38] sm:$0xff]
    %v820 = vld [vmem:[%s4 + $0x40] sm:$0xff]
    %v821 = vld [vmem:[%s4 + $0x48] sm:$0xff]
    %v822 = vld [vmem:[%s4 + $0x50] sm:$0xff]
    %v823 = vld [vmem:[%s4 + $0x58] sm:$0xff]
    %v824 = vld [vmem:[%s4 + $0x60] sm:$0xff]
    %v825 = vld [vmem:[%s4 + $0x68] sm:$0xff]
    %v826 = vld [vmem:[%s4 + $0x70] sm:$0xff]
    %v827 = vld [vmem:[%s4 + $0x78] sm:$0xff]
    %v828 = vld [vmem:[%s4 + $0x80] sm:$0xff]
    %v829 = vld [vmem:[%s4 + $0x88] sm:$0xff]
    %v830 = vld [vmem:[%s4 + $0x90] sm:$0xff]
    %v831 = vld [vmem:[%s4 + $0x98] sm:$0xff]
    %v832 = vld [vmem:[%s4 + $0xa0] sm:$0xff]
    %v833 = vld [vmem:[%s4 + $0xa8] sm:$0xff]
    %v834 = vld [vmem:[%s4 + $0xb0] sm:$0xff]
    %v835 = vld [vmem:[%s4 + $0xb8] sm:$0xff]
    %v836 = vld [vmem:[%s4 + $0xc0] sm:$0xff]
    %v837 = vld [vmem:[%s4 + $0xc8] sm:$0xff]
    %v838 = vld [vmem:[%s4 + $0xd0] sm:$0xff]
    %v839 = vld [vmem:[%s4 + $0xd8] sm:$0xff]
    %v840 = vld [vmem:[%s4 + $0xe0] sm:$0xff]
    %v841 = vld [vmem:[%s4 + $0xe8] sm:$0xff]
    %v842 = vld [vmem:[%s4 + $0xf0] sm:$0xff]
    %v843 = vld [vmem:[%s4 + $0xf8] sm:$0xff]
    %v844 = vld [vmem:[%s4 + $0x100] sm:$0xff]
    %v845 = vld [vmem:[%s4 + $0x108] sm:$0xff]
    %v846 = vld [vmem:[%s4 + $0x110] sm:$0xff]
    %v847 = vld [vmem:[%s4 + $0x118] sm:$0xff]
    %v848 = vld [vmem:[%s4 + $0x120] sm:$0xff]
    %v849 = vld [vmem:[%s4 + $0x128] sm:$0xff]
    %v850 = vld [vmem:[%s4 + $0x130] sm:$0xff]
    %v851 = vld [vmem:[%s4 + $0x138] sm:$0xff]
    %v852 = vld [vmem:[%s4 + $0x140] sm:$0xff]
    %v853 = vld [vmem:[%s4 + $0x148] sm:$0xff]
    %v854 = vld [vmem:[%s4 + $0x150] sm:$0xff]
    %v855 = vld [vmem:[%s4 + $0x158] sm:$0xff]
    %v856 = vld [vmem:[%s4 + $0x160] sm:$0xff]
    %v857 = vld [vmem:[%s4 + $0x168] sm:$0xff]
    %v858 = vld [vmem:[%s4 + $0x170] sm:$0xff]
    %v859 = vld [vmem:[%s4 + $0x178] sm:$0xff]
    %v860 = vld [vmem:[%s4 + $0x180] sm:$0xff]
    %v861 = vld [vmem:[%s4 + $0x188] sm:$0xff]
    %v862 = vld [vmem:[%s4 + $0x190] sm:$0xff]
    %v863 = vld [vmem:[%s4 + $0x198] sm:$0xff]
    %v864 = vld [vmem:[%s4 + $0x1a0] sm:$0xff]
    %v865 = vld [vmem:[%s4 + $0x1a8] sm:$0xff]
    %v866 = vld [vmem:[%s4 + $0x1b0] sm:$0xff]
    %v867 = vld [vmem:[%s4 + $0x1b8] sm:$0xff]
    %v868 = vld [vmem:[%s4 + $0x1c0] sm:$0xff]
    %v869 = vld [vmem:[%s4 + $0x1c8] sm:$0xff]
    %v870 = vld [vmem:[%s4 + $0x1d0] sm:$0xff]
    %v871 = vld [vmem:[%s4 + $0x1d8] sm:$0xff]
    %v872 = vld [vmem:[%s4 + $0x1e0] sm:$0xff]
    %v873 = vld [vmem:[%s4 + $0x1e8] sm:$0xff]
    %v874 = vld [vmem:[%s4 + $0x1f0] sm:$0xff]
    %v875 = vld [vmem:[%s4 + $0x1f8] sm:$0xff]
    %v876 = vld [vmem:[%s4 + $0x200] sm:$0xff]
    %v877 = vld [vmem:[%s4 + $0x208] sm:$0xff]
    %v878 = vld [vmem:[%s4 + $0x210] sm:$0xff]
    %v879 = vld [vmem:[%s4 + $0x218] sm:$0xff]
    %v880 = vld [vmem:[%s4 + $0x220] sm:$0xff]
    %v881 = vld [vmem:[%s4 + $0x228] sm:$0xff]
    %v882 = vld [vmem:[%s4 + $0x230] sm:$0xff]
    %v883 = vld [vmem:[%s4 + $0x238] sm:$0xff]
    %885 = vset.pattern.permute.xlu0 0
    %886 = vperm.xlu0 %885, %v812
    %v887 = vpop.permute.xlu0 %886
    %890 = vset.pattern.permute.xlu0 0
    %891 = vperm.xlu0 %890, %v813
    %v892 = vpop.permute.xlu0 %891
    %895 = vset.pattern.permute.xlu0 0
    %896 = vperm.xlu0 %895, %v814
    %v897 = vpop.permute.xlu0 %896
    %900 = vset.pattern.permute.xlu0 0
    %901 = vperm.xlu0 %900, %v815
    %v902 = vpop.permute.xlu0 %901
    %905 = vset.pattern.permute.xlu0 0
    %906 = vperm.xlu0 %905, %v816
    %v907 = vpop.permute.xlu0 %906
    %910 = vset.pattern.permute.xlu0 0
    %911 = vperm.xlu0 %910, %v817
    %v912 = vpop.permute.xlu0 %911
    %915 = vset.pattern.permute.xlu0 0
    %916 = vperm.xlu0 %915, %v818
    %v917 = vpop.permute.xlu0 %916
    %920 = vset.pattern.permute.xlu0 0
    %921 = vperm.xlu0 %920, %v819
    %v922 = vpop.permute.xlu0 %921
    %925 = vset.pattern.permute.xlu0 0
    %926 = vperm.xlu0 %925, %v820
    %v927 = vpop.permute.xlu0 %926
    %930 = vset.pattern.permute.xlu0 0
    %931 = vperm.xlu0 %930, %v821
    %v932 = vpop.permute.xlu0 %931
    %935 = vset.pattern.permute.xlu0 0
    %936 = vperm.xlu0 %935, %v822
    %v937 = vpop.permute.xlu0 %936
    %940 = vset.pattern.permute.xlu0 0
    %941 = vperm.xlu0 %940, %v823
    %v942 = vpop.permute.xlu0 %941
    %945 = vset.pattern.permute.xlu0 0
    %946 = vperm.xlu0 %945, %v824
    %v947 = vpop.permute.xlu0 %946
    %950 = vset.pattern.permute.xlu0 0
    %951 = vperm.xlu0 %950, %v825
    %v952 = vpop.permute.xlu0 %951
    %955 = vset.pattern.permute.xlu0 0
    %956 = vperm.xlu0 %955, %v826
    %v957 = vpop.permute.xlu0 %956
    %960 = vset.pattern.permute.xlu0 0
    %961 = vperm.xlu0 %960, %v827
    %v962 = vpop.permute.xlu0 %961
    %965 = vset.pattern.permute.xlu0 0
    %966 = vperm.xlu0 %965, %v828
    %v967 = vpop.permute.xlu0 %966
    %970 = vset.pattern.permute.xlu0 0
    %971 = vperm.xlu0 %970, %v829
    %v972 = vpop.permute.xlu0 %971
    %975 = vset.pattern.permute.xlu0 0
    %976 = vperm.xlu0 %975, %v830
    %v977 = vpop.permute.xlu0 %976
    %980 = vset.pattern.permute.xlu0 0
    %981 = vperm.xlu0 %980, %v831
    %v982 = vpop.permute.xlu0 %981
    %985 = vset.pattern.permute.xlu0 0
    %986 = vperm.xlu0 %985, %v832
    %v987 = vpop.permute.xlu0 %986
    %990 = vset.pattern.permute.xlu0 0
    %991 = vperm.xlu0 %990, %v833
    %v992 = vpop.permute.xlu0 %991
    %995 = vset.pattern.permute.xlu0 0
    %996 = vperm.xlu0 %995, %v834
    %v997 = vpop.permute.xlu0 %996
    %1000 = vset.pattern.permute.xlu0 0
    %1001 = vperm.xlu0 %1000, %v835
    %v1002 = vpop.permute.xlu0 %1001
    %1005 = vset.pattern.permute.xlu0 0
    %1006 = vperm.xlu0 %1005, %v836
    %v1007 = vpop.permute.xlu0 %1006
    %1010 = vset.pattern.permute.xlu0 0
    %1011 = vperm.xlu0 %1010, %v837
    %v1012 = vpop.permute.xlu0 %1011
    %1015 = vset.pattern.permute.xlu0 0
    %1016 = vperm.xlu0 %1015, %v838
    %v1017 = vpop.permute.xlu0 %1016
    %1020 = vset.pattern.permute.xlu0 0
    %1021 = vperm.xlu0 %1020, %v839
    %v1022 = vpop.permute.xlu0 %1021
    %1025 = vset.pattern.permute.xlu0 0
    %1026 = vperm.xlu0 %1025, %v840
    %v1027 = vpop.permute.xlu0 %1026
    %1030 = vset.pattern.permute.xlu0 0
    %1031 = vperm.xlu0 %1030, %v841
    %v1032 = vpop.permute.xlu0 %1031
    %1035 = vset.pattern.permute.xlu0 0
    %1036 = vperm.xlu0 %1035, %v842
    %v1037 = vpop.permute.xlu0 %1036
    %1040 = vset.pattern.permute.xlu0 0
    %1041 = vperm.xlu0 %1040, %v843
    %v1042 = vpop.permute.xlu0 %1041
    %1045 = vset.pattern.permute.xlu0 0
    %1046 = vperm.xlu0 %1045, %v844
    %v1047 = vpop.permute.xlu0 %1046
    %1050 = vset.pattern.permute.xlu0 0
    %1051 = vperm.xlu0 %1050, %v845
    %v1052 = vpop.permute.xlu0 %1051
    %1055 = vset.pattern.permute.xlu0 0
    %1056 = vperm.xlu0 %1055, %v846
    %v1057 = vpop.permute.xlu0 %1056
    %1060 = vset.pattern.permute.xlu0 0
    %1061 = vperm.xlu0 %1060, %v847
    %v1062 = vpop.permute.xlu0 %1061
    %1065 = vset.pattern.permute.xlu0 0
    %1066 = vperm.xlu0 %1065, %v848
    %v1067 = vpop.permute.xlu0 %1066
    %1070 = vset.pattern.permute.xlu0 0
    %1071 = vperm.xlu0 %1070, %v849
    %v1072 = vpop.permute.xlu0 %1071
    %1075 = vset.pattern.permute.xlu0 0
    %1076 = vperm.xlu0 %1075, %v850
    %v1077 = vpop.permute.xlu0 %1076
    %1080 = vset.pattern.permute.xlu0 0
    %1081 = vperm.xlu0 %1080, %v851
    %v1082 = vpop.permute.xlu0 %1081
    %1085 = vset.pattern.permute.xlu0 0
    %1086 = vperm.xlu0 %1085, %v852
    %v1087 = vpop.permute.xlu0 %1086
    %1090 = vset.pattern.permute.xlu0 0
    %1091 = vperm.xlu0 %1090, %v853
    %v1092 = vpop.permute.xlu0 %1091
    %1095 = vset.pattern.permute.xlu0 0
    %1096 = vperm.xlu0 %1095, %v854
    %v1097 = vpop.permute.xlu0 %1096
    %1100 = vset.pattern.permute.xlu0 0
    %1101 = vperm.xlu0 %1100, %v855
    %v1102 = vpop.permute.xlu0 %1101
    %1105 = vset.pattern.permute.xlu0 0
    %1106 = vperm.xlu0 %1105, %v856
    %v1107 = vpop.permute.xlu0 %1106
    %1110 = vset.pattern.permute.xlu0 0
    %1111 = vperm.xlu0 %1110, %v857
    %v1112 = vpop.permute.xlu0 %1111
    %1115 = vset.pattern.permute.xlu0 0
    %1116 = vperm.xlu0 %1115, %v858
    %v1117 = vpop.permute.xlu0 %1116
    %1120 = vset.pattern.permute.xlu0 0
    %1121 = vperm.xlu0 %1120, %v859
    %v1122 = vpop.permute.xlu0 %1121
    %1125 = vset.pattern.permute.xlu0 0
    %1126 = vperm.xlu0 %1125, %v860
    %v1127 = vpop.permute.xlu0 %1126
    %1130 = vset.pattern.permute.xlu0 0
    %1131 = vperm.xlu0 %1130, %v861
    %v1132 = vpop.permute.xlu0 %1131
    %1135 = vset.pattern.permute.xlu0 0
    %1136 = vperm.xlu0 %1135, %v862
    %v1137 = vpop.permute.xlu0 %1136
    %1140 = vset.pattern.permute.xlu0 0
    %1141 = vperm.xlu0 %1140, %v863
    %v1142 = vpop.permute.xlu0 %1141
    %1145 = vset.pattern.permute.xlu0 0
    %1146 = vperm.xlu0 %1145, %v864
    %v1147 = vpop.permute.xlu0 %1146
    %1150 = vset.pattern.permute.xlu0 0
    %1151 = vperm.xlu0 %1150, %v865
    %v1152 = vpop.permute.xlu0 %1151
    %1155 = vset.pattern.permute.xlu0 0
    %1156 = vperm.xlu0 %1155, %v866
    %v1157 = vpop.permute.xlu0 %1156
    %1160 = vset.pattern.permute.xlu0 0
    %1161 = vperm.xlu0 %1160, %v867
    %v1162 = vpop.permute.xlu0 %1161
    %1165 = vset.pattern.permute.xlu0 0
    %1166 = vperm.xlu0 %1165, %v868
    %v1167 = vpop.permute.xlu0 %1166
    %1170 = vset.pattern.permute.xlu0 0
    %1171 = vperm.xlu0 %1170, %v869
    %v1172 = vpop.permute.xlu0 %1171
    %1175 = vset.pattern.permute.xlu0 0
    %1176 = vperm.xlu0 %1175, %v870
    %v1177 = vpop.permute.xlu0 %1176
    %1180 = vset.pattern.permute.xlu0 0
    %1181 = vperm.xlu0 %1180, %v871
    %v1182 = vpop.permute.xlu0 %1181
    %1185 = vset.pattern.permute.xlu0 0
    %1186 = vperm.xlu0 %1185, %v872
    %v1187 = vpop.permute.xlu0 %1186
    %1190 = vset.pattern.permute.xlu0 0
    %1191 = vperm.xlu0 %1190, %v873
    %v1192 = vpop.permute.xlu0 %1191
    %1195 = vset.pattern.permute.xlu0 0
    %1196 = vperm.xlu0 %1195, %v874
    %v1197 = vpop.permute.xlu0 %1196
    %1200 = vset.pattern.permute.xlu0 0
    %1201 = vperm.xlu0 %1200, %v875
    %v1202 = vpop.permute.xlu0 %1201
    %1205 = vset.pattern.permute.xlu0 0
    %1206 = vperm.xlu0 %1205, %v876
    %v1207 = vpop.permute.xlu0 %1206
    %1210 = vset.pattern.permute.xlu0 0
    %1211 = vperm.xlu0 %1210, %v877
    %v1212 = vpop.permute.xlu0 %1211
    %1215 = vset.pattern.permute.xlu0 0
    %1216 = vperm.xlu0 %1215, %v878
    %v1217 = vpop.permute.xlu0 %1216
    %1220 = vset.pattern.permute.xlu0 0
    %1221 = vperm.xlu0 %1220, %v879
    %v1222 = vpop.permute.xlu0 %1221
    %1225 = vset.pattern.permute.xlu0 0
    %1226 = vperm.xlu0 %1225, %v880
    %v1227 = vpop.permute.xlu0 %1226
    %1230 = vset.pattern.permute.xlu0 0
    %1231 = vperm.xlu0 %1230, %v881
    %v1232 = vpop.permute.xlu0 %1231
    %1235 = vset.pattern.permute.xlu0 0
    %1236 = vperm.xlu0 %1235, %v882
    %v1237 = vpop.permute.xlu0 %1236
    %1240 = vset.pattern.permute.xlu0 0
    %1241 = vperm.xlu0 %1240, %v883
    %v1242 = vpop.permute.xlu0 %1241
    %v1388 = vunpack.c.l.b16 %v650
    %v1389 = vunpack.c.h.b16 %v650
    %v1390 = vunpack.c.l.b16 %v651
    %v1391 = vunpack.c.l.b16 %v652
    %v1392 = vunpack.c.h.b16 %v652
    %v1393 = vunpack.c.l.b16 %v653
    %v1394 = vunpack.c.l.b16 %v654
    %v1395 = vunpack.c.h.b16 %v654
    %v1396 = vunpack.c.l.b16 %v655
    %v1397 = vunpack.c.l.b16 %v656
    %v1398 = vunpack.c.h.b16 %v656
    %v1399 = vunpack.c.l.b16 %v657
    %v1400 = vunpack.c.l.b16 %v658
    %v1401 = vunpack.c.h.b16 %v658
    %v1402 = vunpack.c.l.b16 %v659
    %v1403 = vunpack.c.l.b16 %v660
    %v1404 = vunpack.c.h.b16 %v660
    %v1405 = vunpack.c.l.b16 %v661
    %v1406 = vunpack.c.l.b16 %v662
    %v1407 = vunpack.c.h.b16 %v662
    %v1408 = vunpack.c.l.b16 %v663
    %v1409 = vunpack.c.l.b16 %v664
    %v1410 = vunpack.c.h.b16 %v664
    %v1411 = vunpack.c.l.b16 %v665
    %v1412 = vunpack.c.l.b16 %v666
    %v1413 = vunpack.c.h.b16 %v666
    %v1414 = vunpack.c.l.b16 %v667
    %v1415 = vunpack.c.l.b16 %v668
    %v1416 = vunpack.c.h.b16 %v668
    %v1417 = vunpack.c.l.b16 %v669
    %v1418 = vunpack.c.l.b16 %v670
    %v1419 = vunpack.c.h.b16 %v670
    %v1420 = vunpack.c.l.b16 %v671
    %v1421 = vunpack.c.l.b16 %v672
    %v1422 = vunpack.c.h.b16 %v672
    %v1423 = vunpack.c.l.b16 %v673
    %v1424 = vunpack.c.l.b16 %v674
    %v1425 = vunpack.c.h.b16 %v674
    %v1426 = vunpack.c.l.b16 %v675
    %v1427 = vunpack.c.l.b16 %v676
    %v1428 = vunpack.c.h.b16 %v676
    %v1429 = vunpack.c.l.b16 %v677
    %v1430 = vunpack.c.l.b16 %v678
    %v1431 = vunpack.c.h.b16 %v678
    %v1432 = vunpack.c.l.b16 %v679
    %v1433 = vunpack.c.l.b16 %v680
    %v1434 = vunpack.c.h.b16 %v680
    %v1435 = vunpack.c.l.b16 %v681
    %v1436 = vunpack.c.l.b16 %v682
    %v1437 = vunpack.c.h.b16 %v682
    %v1438 = vunpack.c.l.b16 %v683
    %v1439 = vunpack.c.l.b16 %v684
    %v1440 = vunpack.c.h.b16 %v684
    %v1441 = vunpack.c.l.b16 %v685
    %v1442 = vunpack.c.l.b16 %v686
    %v1443 = vunpack.c.h.b16 %v686
    %v1444 = vunpack.c.l.b16 %v687
    %v1445 = vunpack.c.l.b16 %v688
    %v1446 = vunpack.c.h.b16 %v688
    %v1447 = vunpack.c.l.b16 %v689
    %v1448 = vunpack.c.l.b16 %v690
    %v1449 = vunpack.c.h.b16 %v690
    %v1450 = vunpack.c.l.b16 %v691
    %v1451 = vunpack.c.l.b16 %v692
    %v1452 = vunpack.c.h.b16 %v692
    %v1453 = vunpack.c.l.b16 %v693
    %v1454 = vunpack.c.l.b16 %v694
    %v1455 = vunpack.c.h.b16 %v694
    %v1456 = vunpack.c.l.b16 %v695
    %v1457 = vunpack.c.l.b16 %v696
    %v1458 = vunpack.c.h.b16 %v696
    %v1459 = vunpack.c.l.b16 %v697
    %v1460 = vunpack.c.l.b16 %v698
    %v1461 = vunpack.c.h.b16 %v698
    %v1462 = vunpack.c.l.b16 %v699
    %v1463 = vunpack.c.l.b16 %v700
    %v1464 = vunpack.c.h.b16 %v700
    %v1465 = vunpack.c.l.b16 %v701
    %v1466 = vunpack.c.l.b16 %v702
    %v1467 = vunpack.c.h.b16 %v702
    %v1468 = vunpack.c.l.b16 %v703
    %v1469 = vunpack.c.l.b16 %v704
    %v1470 = vunpack.c.h.b16 %v704
    %v1471 = vunpack.c.l.b16 %v705
    %v1472 = vunpack.c.l.b16 %v706
    %v1473 = vunpack.c.h.b16 %v706
    %v1474 = vunpack.c.l.b16 %v707
    %v1475 = vunpack.c.l.b16 %v708
    %v1476 = vunpack.c.h.b16 %v708
    %v1477 = vunpack.c.l.b16 %v709
    %v1478 = vunpack.c.l.b16 %v710
    %v1479 = vunpack.c.h.b16 %v710
    %v1480 = vunpack.c.l.b16 %v711
    %v1481 = vunpack.c.l.b16 %v712
    %v1482 = vunpack.c.h.b16 %v712
    %v1483 = vunpack.c.l.b16 %v713
    %v1484 = vunpack.c.l.b16 %v714
    %v1485 = vunpack.c.h.b16 %v714
    %v1486 = vunpack.c.l.b16 %v715
    %v1487 = vunpack.c.l.b16 %v716
    %v1488 = vunpack.c.h.b16 %v716
    %v1489 = vunpack.c.l.b16 %v717
    %v1490 = vunpack.c.l.b16 %v718
    %v1491 = vunpack.c.h.b16 %v718
    %v1492 = vunpack.c.l.b16 %v719
    %v1493 = vunpack.c.l.b16 %v720
    %v1494 = vunpack.c.h.b16 %v720
    %v1495 = vunpack.c.l.b16 %v721
    %v1496 = vunpack.c.l.b16 %v722
    %v1497 = vunpack.c.h.b16 %v722
    %v1498 = vunpack.c.l.b16 %v723
    %v1499 = vunpack.c.l.b16 %v724
    %v1500 = vunpack.c.h.b16 %v724
    %v1501 = vunpack.c.l.b16 %v725
    %v1502 = vunpack.c.l.b16 %v726
    %v1503 = vunpack.c.h.b16 %v726
    %v1504 = vunpack.c.l.b16 %v727
    %v1505 = vunpack.c.l.b16 %v728
    %v1506 = vunpack.c.h.b16 %v728
    %v1507 = vunpack.c.l.b16 %v729
    %v1508 = vunpack.c.l.b16 %v730
    %v1509 = vunpack.c.h.b16 %v730
    %v1510 = vunpack.c.l.b16 %v731
    %v1511 = vunpack.c.l.b16 %v732
    %v1512 = vunpack.c.h.b16 %v732
    %v1513 = vunpack.c.l.b16 %v733
    %v1514 = vunpack.c.l.b16 %v734
    %v1515 = vunpack.c.h.b16 %v734
    %v1516 = vunpack.c.l.b16 %v735
    %v1517 = vunpack.c.l.b16 %v736
    %v1518 = vunpack.c.h.b16 %v736
    %v1519 = vunpack.c.l.b16 %v737
    %v1520 = vunpack.c.l.b16 %v738
    %v1521 = vunpack.c.h.b16 %v738
    %v1522 = vunpack.c.l.b16 %v739
    %v1523 = vunpack.c.l.b16 %v740
    %v1524 = vunpack.c.h.b16 %v740
    %v1525 = vunpack.c.l.b16 %v741
    %v1526 = vunpack.c.l.b16 %v742
    %v1527 = vunpack.c.h.b16 %v742
    %v1528 = vunpack.c.l.b16 %v743
    %v1529 = vunpack.c.l.b16 %v744
    %v1530 = vunpack.c.h.b16 %v744
    %v1531 = vunpack.c.l.b16 %v745
    %v1532 = vunpack.c.l.b16 %v746
    %v1533 = vunpack.c.h.b16 %v746
    %v1534 = vunpack.c.l.b16 %v747
    %v1535 = vunpack.c.l.b16 %v748
    %v1536 = vunpack.c.h.b16 %v748
    %v1537 = vunpack.c.l.b16 %v749
    %v1538 = vunpack.c.l.b16 %v750
    %v1539 = vunpack.c.h.b16 %v750
    %v1540 = vunpack.c.l.b16 %v751
    %v1541 = vunpack.c.l.b16 %v752
    %v1542 = vunpack.c.h.b16 %v752
    %v1543 = vunpack.c.l.b16 %v753
    %v1544 = vunpack.c.l.b16 %v754
    %v1545 = vunpack.c.h.b16 %v754
    %v1546 = vunpack.c.l.b16 %v755
    %v1547 = vunpack.c.l.b16 %v756
    %v1548 = vunpack.c.h.b16 %v756
    %v1549 = vunpack.c.l.b16 %v757
    %v1550 = vunpack.c.l.b16 %v758
    %v1551 = vunpack.c.h.b16 %v758
    %v1552 = vunpack.c.l.b16 %v759
    %v1553 = vunpack.c.l.b16 %v760
    %v1554 = vunpack.c.h.b16 %v760
    %v1555 = vunpack.c.l.b16 %v761
    %v1556 = vunpack.c.l.b16 %v762
    %v1557 = vunpack.c.h.b16 %v762
    %v1558 = vunpack.c.l.b16 %v763
    %v1559 = vunpack.c.l.b16 %v764
    %v1560 = vunpack.c.h.b16 %v764
    %v1561 = vunpack.c.l.b16 %v765
    %v1562 = vunpack.c.l.b16 %v766
    %v1563 = vunpack.c.h.b16 %v766
    %v1564 = vunpack.c.l.b16 %v767
    %v1565 = vunpack.c.l.b16 %v768
    %v1566 = vunpack.c.h.b16 %v768
    %v1567 = vunpack.c.l.b16 %v769
    %v1568 = vunpack.c.l.b16 %v770
    %v1569 = vunpack.c.h.b16 %v770
    %v1570 = vunpack.c.l.b16 %v771
    %v1571 = vunpack.c.l.b16 %v772
    %v1572 = vunpack.c.h.b16 %v772
    %v1573 = vunpack.c.l.b16 %v773
    %v1574 = vunpack.c.l.b16 %v774
    %v1575 = vunpack.c.h.b16 %v774
    %v1576 = vunpack.c.l.b16 %v775
    %v1577 = vunpack.c.l.b16 %v776
    %v1578 = vunpack.c.h.b16 %v776
    %v1579 = vunpack.c.l.b16 %v777
    %v1580 = vunpack.c.l.b16 %v778
    %v1581 = vunpack.c.h.b16 %v778
    %v1582 = vunpack.c.l.b16 %v779
    %v1583 = vunpack.c.l.b16 %v780
    %v1584 = vunpack.c.h.b16 %v780
    %v1585 = vunpack.c.l.b16 %v781
    %v1586 = vunpack.c.l.b16 %v782
    %v1587 = vunpack.c.h.b16 %v782
    %v1588 = vunpack.c.l.b16 %v783
    %v1589 = vunpack.c.l.b16 %v784
    %v1590 = vunpack.c.h.b16 %v784
    %v1591 = vunpack.c.l.b16 %v785
    %v1592 = vunpack.c.l.b16 %v786
    %v1593 = vunpack.c.h.b16 %v786
    %v1594 = vunpack.c.l.b16 %v787
    %v1595 = vunpack.c.l.b16 %v788
    %v1596 = vunpack.c.h.b16 %v788
    %v1597 = vunpack.c.l.b16 %v789
    %v1598 = vunpack.c.l.b16 %v790
    %v1599 = vunpack.c.h.b16 %v790
    %v1600 = vunpack.c.l.b16 %v791
    %v1601 = vunpack.c.l.b16 %v792
    %v1602 = vunpack.c.h.b16 %v792
    %v1603 = vunpack.c.l.b16 %v793
    %v1604 = vpack.c.b16 %v1391, %v1388
    %v1605 = vpack.c.b16 %v1392, %v1389
    %v1606 = vpack.c.b16 %v1393, %v1390
    %v1607 = vpack.c.b16 %v1397, %v1394
    %v1608 = vpack.c.b16 %v1398, %v1395
    %v1609 = vpack.c.b16 %v1399, %v1396
    %v1610 = vpack.c.b16 %v1403, %v1400
    %v1611 = vpack.c.b16 %v1404, %v1401
    %v1612 = vpack.c.b16 %v1405, %v1402
    %v1613 = vpack.c.b16 %v1409, %v1406
    %v1614 = vpack.c.b16 %v1410, %v1407
    %v1615 = vpack.c.b16 %v1411, %v1408
    %v1616 = vpack.c.b16 %v1415, %v1412
    %v1617 = vpack.c.b16 %v1416, %v1413
    %v1618 = vpack.c.b16 %v1417, %v1414
    %v1619 = vpack.c.b16 %v1421, %v1418
    %v1620 = vpack.c.b16 %v1422, %v1419
    %v1621 = vpack.c.b16 %v1423, %v1420
    %v1622 = vpack.c.b16 %v1427, %v1424
    %v1623 = vpack.c.b16 %v1428, %v1425
    %v1624 = vpack.c.b16 %v1429, %v1426
    %v1625 = vpack.c.b16 %v1433, %v1430
    %v1626 = vpack.c.b16 %v1434, %v1431
    %v1627 = vpack.c.b16 %v1435, %v1432
    %v1628 = vpack.c.b16 %v1439, %v1436
    %v1629 = vpack.c.b16 %v1440, %v1437
    %v1630 = vpack.c.b16 %v1441, %v1438
    %v1631 = vpack.c.b16 %v1445, %v1442
    %v1632 = vpack.c.b16 %v1446, %v1443
    %v1633 = vpack.c.b16 %v1447, %v1444
    %v1634 = vpack.c.b16 %v1451, %v1448
    %v1635 = vpack.c.b16 %v1452, %v1449
    %v1636 = vpack.c.b16 %v1453, %v1450
    %v1637 = vpack.c.b16 %v1457, %v1454
    %v1638 = vpack.c.b16 %v1458, %v1455
    %v1639 = vpack.c.b16 %v1459, %v1456
    %v1640 = vpack.c.b16 %v1463, %v1460
    %v1641 = vpack.c.b16 %v1464, %v1461
    %v1642 = vpack.c.b16 %v1465, %v1462
    %v1643 = vpack.c.b16 %v1469, %v1466
    %v1644 = vpack.c.b16 %v1470, %v1467
    %v1645 = vpack.c.b16 %v1471, %v1468
    %v1646 = vpack.c.b16 %v1475, %v1472
    %v1647 = vpack.c.b16 %v1476, %v1473
    %v1648 = vpack.c.b16 %v1477, %v1474
    %v1649 = vpack.c.b16 %v1481, %v1478
    %v1650 = vpack.c.b16 %v1482, %v1479
    %v1651 = vpack.c.b16 %v1483, %v1480
    %v1652 = vpack.c.b16 %v1487, %v1484
    %v1653 = vpack.c.b16 %v1488, %v1485
    %v1654 = vpack.c.b16 %v1489, %v1486
    %v1655 = vpack.c.b16 %v1493, %v1490
    %v1656 = vpack.c.b16 %v1494, %v1491
    %v1657 = vpack.c.b16 %v1495, %v1492
    %v1658 = vpack.c.b16 %v1499, %v1496
    %v1659 = vpack.c.b16 %v1500, %v1497
    %v1660 = vpack.c.b16 %v1501, %v1498
    %v1661 = vpack.c.b16 %v1505, %v1502
    %v1662 = vpack.c.b16 %v1506, %v1503
    %v1663 = vpack.c.b16 %v1507, %v1504
    %v1664 = vpack.c.b16 %v1511, %v1508
    %v1665 = vpack.c.b16 %v1512, %v1509
    %v1666 = vpack.c.b16 %v1513, %v1510
    %v1667 = vpack.c.b16 %v1517, %v1514
    %v1668 = vpack.c.b16 %v1518, %v1515
    %v1669 = vpack.c.b16 %v1519, %v1516
    %v1670 = vpack.c.b16 %v1523, %v1520
    %v1671 = vpack.c.b16 %v1524, %v1521
    %v1672 = vpack.c.b16 %v1525, %v1522
    %v1673 = vpack.c.b16 %v1529, %v1526
    %v1674 = vpack.c.b16 %v1530, %v1527
    %v1675 = vpack.c.b16 %v1531, %v1528
    %v1676 = vpack.c.b16 %v1535, %v1532
    %v1677 = vpack.c.b16 %v1536, %v1533
    %v1678 = vpack.c.b16 %v1537, %v1534
    %v1679 = vpack.c.b16 %v1541, %v1538
    %v1680 = vpack.c.b16 %v1542, %v1539
    %v1681 = vpack.c.b16 %v1543, %v1540
    %v1682 = vpack.c.b16 %v1547, %v1544
    %v1683 = vpack.c.b16 %v1548, %v1545
    %v1684 = vpack.c.b16 %v1549, %v1546
    %v1685 = vpack.c.b16 %v1553, %v1550
    %v1686 = vpack.c.b16 %v1554, %v1551
    %v1687 = vpack.c.b16 %v1555, %v1552
    %v1688 = vpack.c.b16 %v1559, %v1556
    %v1689 = vpack.c.b16 %v1560, %v1557
    %v1690 = vpack.c.b16 %v1561, %v1558
    %v1691 = vpack.c.b16 %v1565, %v1562
    %v1692 = vpack.c.b16 %v1566, %v1563
    %v1693 = vpack.c.b16 %v1567, %v1564
    %v1694 = vpack.c.b16 %v1571, %v1568
    %v1695 = vpack.c.b16 %v1572, %v1569
    %v1696 = vpack.c.b16 %v1573, %v1570
    %v1697 = vpack.c.b16 %v1577, %v1574
    %v1698 = vpack.c.b16 %v1578, %v1575
    %v1699 = vpack.c.b16 %v1579, %v1576
    %v1700 = vpack.c.b16 %v1583, %v1580
    %v1701 = vpack.c.b16 %v1584, %v1581
    %v1702 = vpack.c.b16 %v1585, %v1582
    %v1703 = vpack.c.b16 %v1589, %v1586
    %v1704 = vpack.c.b16 %v1590, %v1587
    %v1705 = vpack.c.b16 %v1591, %v1588
    %v1706 = vpack.c.b16 %v1595, %v1592
    %v1707 = vpack.c.b16 %v1596, %v1593
    %v1708 = vpack.c.b16 %v1597, %v1594
    %v1709 = vpack.c.b16 %v1601, %v1598
    %v1710 = vpack.c.b16 %v1602, %v1599
    %v1711 = vpack.c.b16 %v1603, %v1600
    %vm1784 = vcmask 261120
    %v1786 = vsel %vm1784, %v1606, 0
    %v1789 = vsel %vm1784, %v1609, 0
    %v1792 = vsel %vm1784, %v1612, 0
    %v1795 = vsel %vm1784, %v1615, 0
    %v1798 = vsel %vm1784, %v1618, 0
    %v1801 = vsel %vm1784, %v1621, 0
    %v1804 = vsel %vm1784, %v1624, 0
    %v1807 = vsel %vm1784, %v1627, 0
    %v1810 = vsel %vm1784, %v1630, 0
    %v1813 = vsel %vm1784, %v1633, 0
    %v1816 = vsel %vm1784, %v1636, 0
    %v1819 = vsel %vm1784, %v1639, 0
    %v1822 = vsel %vm1784, %v1642, 0
    %v1825 = vsel %vm1784, %v1645, 0
    %v1828 = vsel %vm1784, %v1648, 0
    %v1831 = vsel %vm1784, %v1651, 0
    %v1834 = vsel %vm1784, %v1654, 0
    %v1837 = vsel %vm1784, %v1657, 0
    %v1840 = vsel %vm1784, %v1660, 0
    %v1843 = vsel %vm1784, %v1663, 0
    %v1846 = vsel %vm1784, %v1666, 0
    %v1849 = vsel %vm1784, %v1669, 0
    %v1852 = vsel %vm1784, %v1672, 0
    %v1855 = vsel %vm1784, %v1675, 0
    %v1858 = vsel %vm1784, %v1678, 0
    %v1861 = vsel %vm1784, %v1681, 0
    %v1864 = vsel %vm1784, %v1684, 0
    %v1867 = vsel %vm1784, %v1687, 0
    %v1870 = vsel %vm1784, %v1690, 0
    %v1873 = vsel %vm1784, %v1693, 0
    %v1876 = vsel %vm1784, %v1696, 0
    %v1879 = vsel %vm1784, %v1699, 0
    %v1882 = vsel %vm1784, %v1702, 0
    %v1885 = vsel %vm1784, %v1705, 0
    %v1888 = vsel %vm1784, %v1708, 0
    %v1891 = vsel %vm1784, %v1711, 0
    %1893 = vmatprep.subr.bf16.mxu0 0
    %1894 = vmatpush1.bf16.msra.mxu0 %v801
    %1895 = vmatprep.subr.bf16.mxu0 0
    %1896 = vmatpush1.bf16.msra.mxu0 %v800
    %1897 = vmatprep.subr.bf16.mxu0 0
    %1898 = vmatpush1.bf16.msra.mxu0 %v799
    %1899 = vmatprep.subr.bf16.mxu0 0
    %1900 = vmatpush1.bf16.msra.mxu0 %v798
    %1901 = vmatprep.subr.bf16.mxu0 0
    %1902 = vmatpush1.bf16.msra.mxu0 %v797
    %1903 = vmatprep.subr.bf16.mxu0 0
    %1904 = vmatpush1.bf16.msra.mxu0 %v796
    %1905 = vmatprep.subr.bf16.mxu0 0
    %1906 = vmatpush1.bf16.msra.mxu0 %v795
    %1907 = vmatprep.subr.bf16.mxu0 0
    %1908 = vmatpush1.bf16.msra.mxu0 %v794
    %1909 = vmatprep.subr.bf16.mxu0 0
    %1910 = vmatpush2.bf16.msra.mxu0 %v809
    %1911 = vmatprep.subr.bf16.mxu0 0
    %1912 = vmatpush2.bf16.msra.mxu0 %v808
    %1913 = vmatprep.subr.bf16.mxu0 0
    %1914 = vmatpush2.bf16.msra.mxu0 %v807
    %1915 = vmatprep.subr.bf16.mxu0 0
    %1916 = vmatpush2.bf16.msra.mxu0 %v806
    %1917 = vmatprep.subr.bf16.mxu0 0
    %1918 = vmatpush2.bf16.msra.mxu0 %v805
    %1919 = vmatprep.subr.bf16.mxu0 0
    %1920 = vmatpush2.bf16.msra.mxu0 %v804
    %1921 = vmatprep.subr.bf16.mxu0 0
    %1922 = vmatpush2.bf16.msra.mxu0 %v803
    %1923 = vmatprep.subr.bf16.mxu0 0
    %1924 = vmatpush2.bf16.msra.mxu0 %v802
    %1925 = vmatprep.mubr.bf16.mxu0 %v1605
    %1926 = vmatmul.mubr.bf16.gmra.mxu0 %v1604
    %v1927 = vpop.f32.mrf.mxu0
    %v1928 = vadd.f32 %v887, %v1927
    %v1929 = vpop.f32.mrf.mxu0
    %v1930 = vpop.f32.mrf.mxu0
    %v1931 = vadd.f32 %v892, %v1930
    %v1932 = vpop.f32.mrf.mxu0
    %1933 = vmatprep.mubr.bf16.mxu0 %v1608
    %1934 = vmatmul.mubr.bf16.gmra.mxu0 %v1607
    %v1935 = vpop.f32.mrf.mxu0
    %v1936 = vadd.f32 %v897, %v1935
    %v1937 = vpop.f32.mrf.mxu0
    %v1938 = vpop.f32.mrf.mxu0
    %v1939 = vadd.f32 %v902, %v1938
    %v1940 = vpop.f32.mrf.mxu0
    %1941 = vmatprep.mubr.bf16.mxu0 %v1611
    %1942 = vmatmul.mubr.bf16.gmra.mxu0 %v1610
    %v1943 = vpop.f32.mrf.mxu0
    %v1944 = vadd.f32 %v907, %v1943
    %v1945 = vpop.f32.mrf.mxu0
    %v1946 = vpop.f32.mrf.mxu0
    %v1947 = vadd.f32 %v912, %v1946
    %v1948 = vpop.f32.mrf.mxu0
    %1949 = vmatprep.mubr.bf16.mxu0 %v1614
    %1950 = vmatmul.mubr.bf16.gmra.mxu0 %v1613
    %v1951 = vpop.f32.mrf.mxu0
    %v1952 = vadd.f32 %v917, %v1951
    %v1953 = vpop.f32.mrf.mxu0
    %v1954 = vpop.f32.mrf.mxu0
    %v1955 = vadd.f32 %v922, %v1954
    %v1956 = vpop.f32.mrf.mxu0
    %1957 = vmatprep.mubr.bf16.mxu0 %v1617
    %1958 = vmatmul.mubr.bf16.gmra.mxu0 %v1616
    %v1959 = vpop.f32.mrf.mxu0
    %v1960 = vadd.f32 %v927, %v1959
    %v1961 = vpop.f32.mrf.mxu0
    %v1962 = vpop.f32.mrf.mxu0
    %v1963 = vadd.f32 %v932, %v1962
    %v1964 = vpop.f32.mrf.mxu0
    %1965 = vmatprep.mubr.bf16.mxu0 %v1620
    %1966 = vmatmul.mubr.bf16.gmra.mxu0 %v1619
    %v1967 = vpop.f32.mrf.mxu0
    %v1968 = vadd.f32 %v937, %v1967
    %v1969 = vpop.f32.mrf.mxu0
    %v1970 = vpop.f32.mrf.mxu0
    %v1971 = vadd.f32 %v942, %v1970
    %v1972 = vpop.f32.mrf.mxu0
    %1973 = vmatprep.mubr.bf16.mxu0 %v1623
    %1974 = vmatmul.mubr.bf16.gmra.mxu0 %v1622
    %v1975 = vpop.f32.mrf.mxu0
    %v1976 = vadd.f32 %v947, %v1975
    %v1977 = vpop.f32.mrf.mxu0
    %v1978 = vpop.f32.mrf.mxu0
    %v1979 = vadd.f32 %v952, %v1978
    %v1980 = vpop.f32.mrf.mxu0
    %1981 = vmatprep.mubr.bf16.mxu0 %v1626
    %1982 = vmatmul.mubr.bf16.gmra.mxu0 %v1625
    %v1983 = vpop.f32.mrf.mxu0
    %v1984 = vadd.f32 %v957, %v1983
    %v1985 = vpop.f32.mrf.mxu0
    %v1986 = vpop.f32.mrf.mxu0
    %v1987 = vadd.f32 %v962, %v1986
    %v1988 = vpop.f32.mrf.mxu0
    %1989 = vmatprep.mubr.bf16.mxu0 %v1629
    %1990 = vmatmul.mubr.bf16.gmra.mxu0 %v1628
    %v1991 = vpop.f32.mrf.mxu0
    %v1992 = vadd.f32 %v967, %v1991
    %v1993 = vpop.f32.mrf.mxu0
    %v1994 = vpop.f32.mrf.mxu0
    %v1995 = vadd.f32 %v972, %v1994
    %v1996 = vpop.f32.mrf.mxu0
    %1997 = vmatprep.mubr.bf16.mxu0 %v1632
    %1998 = vmatmul.mubr.bf16.gmra.mxu0 %v1631
    %v1999 = vpop.f32.mrf.mxu0
    %v2000 = vadd.f32 %v977, %v1999
    %v2001 = vpop.f32.mrf.mxu0
    %v2002 = vpop.f32.mrf.mxu0
    %v2003 = vadd.f32 %v982, %v2002
    %v2004 = vpop.f32.mrf.mxu0
    %2005 = vmatprep.mubr.bf16.mxu0 %v1635
    %2006 = vmatmul.mubr.bf16.gmra.mxu0 %v1634
    %v2007 = vpop.f32.mrf.mxu0
    %v2008 = vadd.f32 %v987, %v2007
    %v2009 = vpop.f32.mrf.mxu0
    %v2010 = vpop.f32.mrf.mxu0
    %v2011 = vadd.f32 %v992, %v2010
    %v2012 = vpop.f32.mrf.mxu0
    %2013 = vmatprep.mubr.bf16.mxu0 %v1638
    %2014 = vmatmul.mubr.bf16.gmra.mxu0 %v1637
    %v2015 = vpop.f32.mrf.mxu0
    %v2016 = vadd.f32 %v997, %v2015
    %v2017 = vpop.f32.mrf.mxu0
    %v2018 = vpop.f32.mrf.mxu0
    %v2019 = vadd.f32 %v1002, %v2018
    %v2020 = vpop.f32.mrf.mxu0
    %2021 = vmatprep.mubr.bf16.mxu0 %v1641
    %2022 = vmatmul.mubr.bf16.gmra.mxu0 %v1640
    %v2023 = vpop.f32.mrf.mxu0
    %v2024 = vadd.f32 %v1007, %v2023
    %v2025 = vpop.f32.mrf.mxu0
    %v2026 = vpop.f32.mrf.mxu0
    %v2027 = vadd.f32 %v1012, %v2026
    %v2028 = vpop.f32.mrf.mxu0
    %2029 = vmatprep.mubr.bf16.mxu0 %v1644
    %2030 = vmatmul.mubr.bf16.gmra.mxu0 %v1643
    %v2031 = vpop.f32.mrf.mxu0
    %v2032 = vadd.f32 %v1017, %v2031
    %v2033 = vpop.f32.mrf.mxu0
    %v2034 = vpop.f32.mrf.mxu0
    %v2035 = vadd.f32 %v1022, %v2034
    %v2036 = vpop.f32.mrf.mxu0
    %2037 = vmatprep.mubr.bf16.mxu0 %v1647
    %2038 = vmatmul.mubr.bf16.gmra.mxu0 %v1646
    %v2039 = vpop.f32.mrf.mxu0
    %v2040 = vadd.f32 %v1027, %v2039
    %v2041 = vpop.f32.mrf.mxu0
    %v2042 = vpop.f32.mrf.mxu0
    %v2043 = vadd.f32 %v1032, %v2042
    %v2044 = vpop.f32.mrf.mxu0
    %2045 = vmatprep.mubr.bf16.mxu0 %v1650
    %2046 = vmatmul.mubr.bf16.gmra.mxu0 %v1649
    %v2047 = vpop.f32.mrf.mxu0
    %v2048 = vadd.f32 %v1037, %v2047
    %v2049 = vpop.f32.mrf.mxu0
    %v2050 = vpop.f32.mrf.mxu0
    %v2051 = vadd.f32 %v1042, %v2050
    %v2052 = vpop.f32.mrf.mxu0
    %2053 = vmatprep.mubr.bf16.mxu0 %v1653
    %2054 = vmatmul.mubr.bf16.gmra.mxu0 %v1652
    %v2055 = vpop.f32.mrf.mxu0
    %v2056 = vadd.f32 %v1047, %v2055
    %v2057 = vpop.f32.mrf.mxu0
    %v2058 = vpop.f32.mrf.mxu0
    %v2059 = vadd.f32 %v1052, %v2058
    %v2060 = vpop.f32.mrf.mxu0
    %2061 = vmatprep.mubr.bf16.mxu0 %v1656
    %2062 = vmatmul.mubr.bf16.gmra.mxu0 %v1655
    %v2063 = vpop.f32.mrf.mxu0
    %v2064 = vadd.f32 %v1057, %v2063
    %v2065 = vpop.f32.mrf.mxu0
    %v2066 = vpop.f32.mrf.mxu0
    %v2067 = vadd.f32 %v1062, %v2066
    %v2068 = vpop.f32.mrf.mxu0
    %2069 = vmatprep.mubr.bf16.mxu0 %v1659
    %2070 = vmatmul.mubr.bf16.gmra.mxu0 %v1658
    %v2071 = vpop.f32.mrf.mxu0
    %v2072 = vadd.f32 %v1067, %v2071
    %v2073 = vpop.f32.mrf.mxu0
    %v2074 = vpop.f32.mrf.mxu0
    %v2075 = vadd.f32 %v1072, %v2074
    %v2076 = vpop.f32.mrf.mxu0
    %2077 = vmatprep.mubr.bf16.mxu0 %v1662
    %2078 = vmatmul.mubr.bf16.gmra.mxu0 %v1661
    %v2079 = vpop.f32.mrf.mxu0
    %v2080 = vadd.f32 %v1077, %v2079
    %v2081 = vpop.f32.mrf.mxu0
    %v2082 = vpop.f32.mrf.mxu0
    %v2083 = vadd.f32 %v1082, %v2082
    %v2084 = vpop.f32.mrf.mxu0
    %2085 = vmatprep.mubr.bf16.mxu0 %v1665
    %2086 = vmatmul.mubr.bf16.gmra.mxu0 %v1664
    %v2087 = vpop.f32.mrf.mxu0
    %v2088 = vadd.f32 %v1087, %v2087
    %v2089 = vpop.f32.mrf.mxu0
    %v2090 = vpop.f32.mrf.mxu0
    %v2091 = vadd.f32 %v1092, %v2090
    %v2092 = vpop.f32.mrf.mxu0
    %2093 = vmatprep.mubr.bf16.mxu0 %v1668
    %2094 = vmatmul.mubr.bf16.gmra.mxu0 %v1667
    %v2095 = vpop.f32.mrf.mxu0
    %v2096 = vadd.f32 %v1097, %v2095
    %v2097 = vpop.f32.mrf.mxu0
    %v2098 = vpop.f32.mrf.mxu0
    %v2099 = vadd.f32 %v1102, %v2098
    %v2100 = vpop.f32.mrf.mxu0
    %2101 = vmatprep.mubr.bf16.mxu0 %v1671
    %2102 = vmatmul.mubr.bf16.gmra.mxu0 %v1670
    %v2103 = vpop.f32.mrf.mxu0
    %v2104 = vadd.f32 %v1107, %v2103
    %v2105 = vpop.f32.mrf.mxu0
    %v2106 = vpop.f32.mrf.mxu0
    %v2107 = vadd.f32 %v1112, %v2106
    %v2108 = vpop.f32.mrf.mxu0
    %2109 = vmatprep.mubr.bf16.mxu0 %v1674
    %2110 = vmatmul.mubr.bf16.gmra.mxu0 %v1673
    %v2111 = vpop.f32.mrf.mxu0
    %v2112 = vadd.f32 %v1117, %v2111
    %v2113 = vpop.f32.mrf.mxu0
    %v2114 = vpop.f32.mrf.mxu0
    %v2115 = vadd.f32 %v1122, %v2114
    %v2116 = vpop.f32.mrf.mxu0
    %2117 = vmatprep.mubr.bf16.mxu0 %v1677
    %2118 = vmatmul.mubr.bf16.gmra.mxu0 %v1676
    %v2119 = vpop.f32.mrf.mxu0
    %v2120 = vadd.f32 %v1127, %v2119
    %v2121 = vpop.f32.mrf.mxu0
    %v2122 = vpop.f32.mrf.mxu0
    %v2123 = vadd.f32 %v1132, %v2122
    %v2124 = vpop.f32.mrf.mxu0
    %2125 = vmatprep.mubr.bf16.mxu0 %v1680
    %2126 = vmatmul.mubr.bf16.gmra.mxu0 %v1679
    %v2127 = vpop.f32.mrf.mxu0
    %v2128 = vadd.f32 %v1137, %v2127
    %v2129 = vpop.f32.mrf.mxu0
    %v2130 = vpop.f32.mrf.mxu0
    %v2131 = vadd.f32 %v1142, %v2130
    %v2132 = vpop.f32.mrf.mxu0
    %2133 = vmatprep.mubr.bf16.mxu0 %v1683
    %2134 = vmatmul.mubr.bf16.gmra.mxu0 %v1682
    %v2135 = vpop.f32.mrf.mxu0
    %v2136 = vadd.f32 %v1147, %v2135
    %v2137 = vpop.f32.mrf.mxu0
    %v2138 = vpop.f32.mrf.mxu0
    %v2139 = vadd.f32 %v1152, %v2138
    %v2140 = vpop.f32.mrf.mxu0
    %2141 = vmatprep.mubr.bf16.mxu0 %v1686
    %2142 = vmatmul.mubr.bf16.gmra.mxu0 %v1685
    %v2143 = vpop.f32.mrf.mxu0
    %v2144 = vadd.f32 %v1157, %v2143
    %v2145 = vpop.f32.mrf.mxu0
    %v2146 = vpop.f32.mrf.mxu0
    %v2147 = vadd.f32 %v1162, %v2146
    %v2148 = vpop.f32.mrf.mxu0
    %2149 = vmatprep.mubr.bf16.mxu0 %v1689
    %2150 = vmatmul.mubr.bf16.gmra.mxu0 %v1688
    %v2151 = vpop.f32.mrf.mxu0
    %v2152 = vadd.f32 %v1167, %v2151
    %v2153 = vpop.f32.mrf.mxu0
    %v2154 = vpop.f32.mrf.mxu0
    %v2155 = vadd.f32 %v1172, %v2154
    %v2156 = vpop.f32.mrf.mxu0
    %2157 = vmatprep.mubr.bf16.mxu0 %v1692
    %2158 = vmatmul.mubr.bf16.gmra.mxu0 %v1691
    %v2159 = vpop.f32.mrf.mxu0
    %v2160 = vadd.f32 %v1177, %v2159
    %v2161 = vpop.f32.mrf.mxu0
    %v2162 = vpop.f32.mrf.mxu0
    %v2163 = vadd.f32 %v1182, %v2162
    %v2164 = vpop.f32.mrf.mxu0
    %2165 = vmatprep.mubr.bf16.mxu0 %v1695
    %2166 = vmatmul.mubr.bf16.gmra.mxu0 %v1694
    %v2167 = vpop.f32.mrf.mxu0
    %v2168 = vadd.f32 %v1187, %v2167
    %v2169 = vpop.f32.mrf.mxu0
    %v2170 = vpop.f32.mrf.mxu0
    %v2171 = vadd.f32 %v1192, %v2170
    %v2172 = vpop.f32.mrf.mxu0
    %2173 = vmatprep.mubr.bf16.mxu0 %v1698
    %2174 = vmatmul.mubr.bf16.gmra.mxu0 %v1697
    %v2175 = vpop.f32.mrf.mxu0
    %v2176 = vadd.f32 %v1197, %v2175
    %v2177 = vpop.f32.mrf.mxu0
    %v2178 = vpop.f32.mrf.mxu0
    %v2179 = vadd.f32 %v1202, %v2178
    %v2180 = vpop.f32.mrf.mxu0
    %2181 = vmatprep.mubr.bf16.mxu0 %v1701
    %2182 = vmatmul.mubr.bf16.gmra.mxu0 %v1700
    %v2183 = vpop.f32.mrf.mxu0
    %v2184 = vadd.f32 %v1207, %v2183
    %v2185 = vpop.f32.mrf.mxu0
    %v2186 = vpop.f32.mrf.mxu0
    %v2187 = vadd.f32 %v1212, %v2186
    %v2188 = vpop.f32.mrf.mxu0
    %2189 = vmatprep.mubr.bf16.mxu0 %v1704
    %2190 = vmatmul.mubr.bf16.gmra.mxu0 %v1703
    %v2191 = vpop.f32.mrf.mxu0
    %v2192 = vadd.f32 %v1217, %v2191
    %v2193 = vpop.f32.mrf.mxu0
    %v2194 = vpop.f32.mrf.mxu0
    %v2195 = vadd.f32 %v1222, %v2194
    %v2196 = vpop.f32.mrf.mxu0
    %2197 = vmatprep.mubr.bf16.mxu0 %v1707
    %2198 = vmatmul.mubr.bf16.gmra.mxu0 %v1706
    %v2199 = vpop.f32.mrf.mxu0
    %v2200 = vadd.f32 %v1227, %v2199
    %v2201 = vpop.f32.mrf.mxu0
    %v2202 = vpop.f32.mrf.mxu0
    %v2203 = vadd.f32 %v1232, %v2202
    %v2204 = vpop.f32.mrf.mxu0
    %2205 = vmatprep.mubr.bf16.mxu0 %v1710
    %2206 = vmatmul.mubr.bf16.gmra.mxu0 %v1709
    %v2207 = vpop.f32.mrf.mxu0
    %v2208 = vadd.f32 %v1237, %v2207
    %v2209 = vpop.f32.mrf.mxu0
    %v2210 = vpop.f32.mrf.mxu0
    %v2211 = vadd.f32 %v1242, %v2210
    %v2212 = vpop.f32.mrf.mxu0
    %2213 = vdwg.mxu0
    %2214 = vmatprep.subr.bf16.mxu0 0
    %2215 = vmatpush1.bf16.msra.mxu0 0
    %2216 = vmatprep.subr.bf16.mxu0 0
    %2217 = vmatpush1.bf16.msra.mxu0 0
    %2218 = vmatprep.subr.bf16.mxu0 0
    %2219 = vmatpush1.bf16.msra.mxu0 0
    %2220 = vmatprep.subr.bf16.mxu0 0
    %2221 = vmatpush1.bf16.msra.mxu0 0
    %2222 = vmatprep.subr.bf16.mxu0 0
    %2223 = vmatpush1.bf16.msra.mxu0 0
    %2224 = vmatprep.subr.bf16.mxu0 0
    %2225 = vmatpush1.bf16.msra.mxu0 0
    %2226 = vmatprep.subr.bf16.mxu0 0
    %2227 = vmatpush1.bf16.msra.mxu0 %v811
    %2228 = vmatprep.subr.bf16.mxu0 0
    %2229 = vmatpush1.bf16.msra.mxu0 %v810
    %2230 = vmatprep.subr.bf16.mxu0 0
    %2231 = vmatpush2.bf16.msra.mxu0 0
    %2232 = vmatprep.subr.bf16.mxu0 0
    %2233 = vmatpush2.bf16.msra.mxu0 0
    %2234 = vmatprep.subr.bf16.mxu0 0
    %2235 = vmatpush2.bf16.msra.mxu0 0
    %2236 = vmatprep.subr.bf16.mxu0 0
    %2237 = vmatpush2.bf16.msra.mxu0 0
    %2238 = vmatprep.subr.bf16.mxu0 0
    %2239 = vmatpush2.bf16.msra.mxu0 0
    %2240 = vmatprep.subr.bf16.mxu0 0
    %2241 = vmatpush2.bf16.msra.mxu0 0
    %2242 = vmatprep.subr.bf16.mxu0 0
    %2243 = vmatpush2.bf16.msra.mxu0 0
    %2244 = vmatprep.subr.bf16.mxu0 0
    %2245 = vmatpush2.bf16.msra.mxu0 0
    %2246 = vmatprep.mubr.bf16.mxu0 0
    %2247 = vmatmul.mubr.bf16.gmra.mxu0 %v1786
    %v2248 = vpop.f32.mrf.mxu0
    %v2249 = vadd.f32 %v1928, %v2248
    %v2250 = vpop.f32.mrf.mxu0
    %v2251 = vpop.f32.mrf.mxu0
    %v2252 = vadd.f32 %v1931, %v2251
    %v2253 = vpop.f32.mrf.mxu0
    %2254 = vmatprep.mubr.bf16.mxu0 0
    %2255 = vmatmul.mubr.bf16.gmra.mxu0 %v1789
    %v2256 = vpop.f32.mrf.mxu0
    %v2257 = vadd.f32 %v1936, %v2256
    %v2258 = vpop.f32.mrf.mxu0
    %v2259 = vpop.f32.mrf.mxu0
    %v2260 = vadd.f32 %v1939, %v2259
    %v2261 = vpop.f32.mrf.mxu0
    %2262 = vmatprep.mubr.bf16.mxu0 0
    %2263 = vmatmul.mubr.bf16.gmra.mxu0 %v1792
    %v2264 = vpop.f32.mrf.mxu0
    %v2265 = vadd.f32 %v1944, %v2264
    %v2266 = vpop.f32.mrf.mxu0
    %v2267 = vpop.f32.mrf.mxu0
    %v2268 = vadd.f32 %v1947, %v2267
    %v2269 = vpop.f32.mrf.mxu0
    %2270 = vmatprep.mubr.bf16.mxu0 0
    %2271 = vmatmul.mubr.bf16.gmra.mxu0 %v1795
    %v2272 = vpop.f32.mrf.mxu0
    %v2273 = vadd.f32 %v1952, %v2272
    %v2274 = vpop.f32.mrf.mxu0
    %v2275 = vpop.f32.mrf.mxu0
    %v2276 = vadd.f32 %v1955, %v2275
    %v2277 = vpop.f32.mrf.mxu0
    %2278 = vmatprep.mubr.bf16.mxu0 0
    %2279 = vmatmul.mubr.bf16.gmra.mxu0 %v1798
    %v2280 = vpop.f32.mrf.mxu0
    %v2281 = vadd.f32 %v1960, %v2280
    %v2282 = vpop.f32.mrf.mxu0
    %v2283 = vpop.f32.mrf.mxu0
    %v2284 = vadd.f32 %v1963, %v2283
    %v2285 = vpop.f32.mrf.mxu0
    %2286 = vmatprep.mubr.bf16.mxu0 0
    %2287 = vmatmul.mubr.bf16.gmra.mxu0 %v1801
    %v2288 = vpop.f32.mrf.mxu0
    %v2289 = vadd.f32 %v1968, %v2288
    %v2290 = vpop.f32.mrf.mxu0
    %v2291 = vpop.f32.mrf.mxu0
    %v2292 = vadd.f32 %v1971, %v2291
    %v2293 = vpop.f32.mrf.mxu0
    %2294 = vmatprep.mubr.bf16.mxu0 0
    %2295 = vmatmul.mubr.bf16.gmra.mxu0 %v1804
    %v2296 = vpop.f32.mrf.mxu0
    %v2297 = vadd.f32 %v1976, %v2296
    %v2298 = vpop.f32.mrf.mxu0
    %v2299 = vpop.f32.mrf.mxu0
    %v2300 = vadd.f32 %v1979, %v2299
    %v2301 = vpop.f32.mrf.mxu0
    %2302 = vmatprep.mubr.bf16.mxu0 0
    %2303 = vmatmul.mubr.bf16.gmra.mxu0 %v1807
    %v2304 = vpop.f32.mrf.mxu0
    %v2305 = vadd.f32 %v1984, %v2304
    %v2306 = vpop.f32.mrf.mxu0
    %v2307 = vpop.f32.mrf.mxu0
    %v2308 = vadd.f32 %v1987, %v2307
    %v2309 = vpop.f32.mrf.mxu0
    %2310 = vmatprep.mubr.bf16.mxu0 0
    %2311 = vmatmul.mubr.bf16.gmra.mxu0 %v1810
    %v2312 = vpop.f32.mrf.mxu0
    %v2313 = vadd.f32 %v1992, %v2312
    %v2314 = vpop.f32.mrf.mxu0
    %v2315 = vpop.f32.mrf.mxu0
    %v2316 = vadd.f32 %v1995, %v2315
    %v2317 = vpop.f32.mrf.mxu0
    %2318 = vmatprep.mubr.bf16.mxu0 0
    %2319 = vmatmul.mubr.bf16.gmra.mxu0 %v1813
    %v2320 = vpop.f32.mrf.mxu0
    %v2321 = vadd.f32 %v2000, %v2320
    %v2322 = vpop.f32.mrf.mxu0
    %v2323 = vpop.f32.mrf.mxu0
    %v2324 = vadd.f32 %v2003, %v2323
    %v2325 = vpop.f32.mrf.mxu0
    %2326 = vmatprep.mubr.bf16.mxu0 0
    %2327 = vmatmul.mubr.bf16.gmra.mxu0 %v1816
    %v2328 = vpop.f32.mrf.mxu0
    %v2329 = vadd.f32 %v2008, %v2328
    %v2330 = vpop.f32.mrf.mxu0
    %v2331 = vpop.f32.mrf.mxu0
    %v2332 = vadd.f32 %v2011, %v2331
    %v2333 = vpop.f32.mrf.mxu0
    %2334 = vmatprep.mubr.bf16.mxu0 0
    %2335 = vmatmul.mubr.bf16.gmra.mxu0 %v1819
    %v2336 = vpop.f32.mrf.mxu0
    %v2337 = vadd.f32 %v2016, %v2336
    %v2338 = vpop.f32.mrf.mxu0
    %v2339 = vpop.f32.mrf.mxu0
    %v2340 = vadd.f32 %v2019, %v2339
    %v2341 = vpop.f32.mrf.mxu0
    %2342 = vmatprep.mubr.bf16.mxu0 0
    %2343 = vmatmul.mubr.bf16.gmra.mxu0 %v1822
    %v2344 = vpop.f32.mrf.mxu0
    %v2345 = vadd.f32 %v2024, %v2344
    %v2346 = vpop.f32.mrf.mxu0
    %v2347 = vpop.f32.mrf.mxu0
    %v2348 = vadd.f32 %v2027, %v2347
    %v2349 = vpop.f32.mrf.mxu0
    %2350 = vmatprep.mubr.bf16.mxu0 0
    %2351 = vmatmul.mubr.bf16.gmra.mxu0 %v1825
    %v2352 = vpop.f32.mrf.mxu0
    %v2353 = vadd.f32 %v2032, %v2352
    %v2354 = vpop.f32.mrf.mxu0
    %v2355 = vpop.f32.mrf.mxu0
    %v2356 = vadd.f32 %v2035, %v2355
    %v2357 = vpop.f32.mrf.mxu0
    %2358 = vmatprep.mubr.bf16.mxu0 0
    %2359 = vmatmul.mubr.bf16.gmra.mxu0 %v1828
    %v2360 = vpop.f32.mrf.mxu0
    %v2361 = vadd.f32 %v2040, %v2360
    %v2362 = vpop.f32.mrf.mxu0
    %v2363 = vpop.f32.mrf.mxu0
    %v2364 = vadd.f32 %v2043, %v2363
    %v2365 = vpop.f32.mrf.mxu0
    %2366 = vmatprep.mubr.bf16.mxu0 0
    %2367 = vmatmul.mubr.bf16.gmra.mxu0 %v1831
    %v2368 = vpop.f32.mrf.mxu0
    %v2369 = vadd.f32 %v2048, %v2368
    %v2370 = vpop.f32.mrf.mxu0
    %v2371 = vpop.f32.mrf.mxu0
    %v2372 = vadd.f32 %v2051, %v2371
    %v2373 = vpop.f32.mrf.mxu0
    %2374 = vmatprep.mubr.bf16.mxu0 0
    %2375 = vmatmul.mubr.bf16.gmra.mxu0 %v1834
    %v2376 = vpop.f32.mrf.mxu0
    %v2377 = vadd.f32 %v2056, %v2376
    %v2378 = vpop.f32.mrf.mxu0
    %v2379 = vpop.f32.mrf.mxu0
    %v2380 = vadd.f32 %v2059, %v2379
    %v2381 = vpop.f32.mrf.mxu0
    %2382 = vmatprep.mubr.bf16.mxu0 0
    %2383 = vmatmul.mubr.bf16.gmra.mxu0 %v1837
    %v2384 = vpop.f32.mrf.mxu0
    %v2385 = vadd.f32 %v2064, %v2384
    %v2386 = vpop.f32.mrf.mxu0
    %v2387 = vpop.f32.mrf.mxu0
    %v2388 = vadd.f32 %v2067, %v2387
    %v2389 = vpop.f32.mrf.mxu0
    %2390 = vmatprep.mubr.bf16.mxu0 0
    %2391 = vmatmul.mubr.bf16.gmra.mxu0 %v1840
    %v2392 = vpop.f32.mrf.mxu0
    %v2393 = vadd.f32 %v2072, %v2392
    %v2394 = vpop.f32.mrf.mxu0
    %v2395 = vpop.f32.mrf.mxu0
    %v2396 = vadd.f32 %v2075, %v2395
    %v2397 = vpop.f32.mrf.mxu0
    %2398 = vmatprep.mubr.bf16.mxu0 0
    %2399 = vmatmul.mubr.bf16.gmra.mxu0 %v1843
    %v2400 = vpop.f32.mrf.mxu0
    %v2401 = vadd.f32 %v2080, %v2400
    %v2402 = vpop.f32.mrf.mxu0
    %v2403 = vpop.f32.mrf.mxu0
    %v2404 = vadd.f32 %v2083, %v2403
    %v2405 = vpop.f32.mrf.mxu0
    %2406 = vmatprep.mubr.bf16.mxu0 0
    %2407 = vmatmul.mubr.bf16.gmra.mxu0 %v1846
    %v2408 = vpop.f32.mrf.mxu0
    %v2409 = vadd.f32 %v2088, %v2408
    %v2410 = vpop.f32.mrf.mxu0
    %v2411 = vpop.f32.mrf.mxu0
    %v2412 = vadd.f32 %v2091, %v2411
    %v2413 = vpop.f32.mrf.mxu0
    %2414 = vmatprep.mubr.bf16.mxu0 0
    %2415 = vmatmul.mubr.bf16.gmra.mxu0 %v1849
    %v2416 = vpop.f32.mrf.mxu0
    %v2417 = vadd.f32 %v2096, %v2416
    %v2418 = vpop.f32.mrf.mxu0
    %v2419 = vpop.f32.mrf.mxu0
    %v2420 = vadd.f32 %v2099, %v2419
    %v2421 = vpop.f32.mrf.mxu0
    %2422 = vmatprep.mubr.bf16.mxu0 0
    %2423 = vmatmul.mubr.bf16.gmra.mxu0 %v1852
    %v2424 = vpop.f32.mrf.mxu0
    %v2425 = vadd.f32 %v2104, %v2424
    %v2426 = vpop.f32.mrf.mxu0
    %v2427 = vpop.f32.mrf.mxu0
    %v2428 = vadd.f32 %v2107, %v2427
    %v2429 = vpop.f32.mrf.mxu0
    %2430 = vmatprep.mubr.bf16.mxu0 0
    %2431 = vmatmul.mubr.bf16.gmra.mxu0 %v1855
    %v2432 = vpop.f32.mrf.mxu0
    %v2433 = vadd.f32 %v2112, %v2432
    %v2434 = vpop.f32.mrf.mxu0
    %v2435 = vpop.f32.mrf.mxu0
    %v2436 = vadd.f32 %v2115, %v2435
    %v2437 = vpop.f32.mrf.mxu0
    %2438 = vmatprep.mubr.bf16.mxu0 0
    %2439 = vmatmul.mubr.bf16.gmra.mxu0 %v1858
    %v2440 = vpop.f32.mrf.mxu0
    %v2441 = vadd.f32 %v2120, %v2440
    %v2442 = vpop.f32.mrf.mxu0
    %v2443 = vpop.f32.mrf.mxu0
    %v2444 = vadd.f32 %v2123, %v2443
    %v2445 = vpop.f32.mrf.mxu0
    %2446 = vmatprep.mubr.bf16.mxu0 0
    %2447 = vmatmul.mubr.bf16.gmra.mxu0 %v1861
    %v2448 = vpop.f32.mrf.mxu0
    %v2449 = vadd.f32 %v2128, %v2448
    %v2450 = vpop.f32.mrf.mxu0
    %v2451 = vpop.f32.mrf.mxu0
    %v2452 = vadd.f32 %v2131, %v2451
    %v2453 = vpop.f32.mrf.mxu0
    %2454 = vmatprep.mubr.bf16.mxu0 0
    %2455 = vmatmul.mubr.bf16.gmra.mxu0 %v1864
    %v2456 = vpop.f32.mrf.mxu0
    %v2457 = vadd.f32 %v2136, %v2456
    %v2458 = vpop.f32.mrf.mxu0
    %v2459 = vpop.f32.mrf.mxu0
    %v2460 = vadd.f32 %v2139, %v2459
    %v2461 = vpop.f32.mrf.mxu0
    %2462 = vmatprep.mubr.bf16.mxu0 0
    %2463 = vmatmul.mubr.bf16.gmra.mxu0 %v1867
    %v2464 = vpop.f32.mrf.mxu0
    %v2465 = vadd.f32 %v2144, %v2464
    %v2466 = vpop.f32.mrf.mxu0
    %v2467 = vpop.f32.mrf.mxu0
    %v2468 = vadd.f32 %v2147, %v2467
    %v2469 = vpop.f32.mrf.mxu0
    %2470 = vmatprep.mubr.bf16.mxu0 0
    %2471 = vmatmul.mubr.bf16.gmra.mxu0 %v1870
    %v2472 = vpop.f32.mrf.mxu0
    %v2473 = vadd.f32 %v2152, %v2472
    %v2474 = vpop.f32.mrf.mxu0
    %v2475 = vpop.f32.mrf.mxu0
    %v2476 = vadd.f32 %v2155, %v2475
    %v2477 = vpop.f32.mrf.mxu0
    %2478 = vmatprep.mubr.bf16.mxu0 0
    %2479 = vmatmul.mubr.bf16.gmra.mxu0 %v1873
    %v2480 = vpop.f32.mrf.mxu0
    %v2481 = vadd.f32 %v2160, %v2480
    %v2482 = vpop.f32.mrf.mxu0
    %v2483 = vpop.f32.mrf.mxu0
    %v2484 = vadd.f32 %v2163, %v2483
    %v2485 = vpop.f32.mrf.mxu0
    %2486 = vmatprep.mubr.bf16.mxu0 0
    %2487 = vmatmul.mubr.bf16.gmra.mxu0 %v1876
    %v2488 = vpop.f32.mrf.mxu0
    %v2489 = vadd.f32 %v2168, %v2488
    %v2490 = vpop.f32.mrf.mxu0
    %v2491 = vpop.f32.mrf.mxu0
    %v2492 = vadd.f32 %v2171, %v2491
    %v2493 = vpop.f32.mrf.mxu0
    %2494 = vmatprep.mubr.bf16.mxu0 0
    %2495 = vmatmul.mubr.bf16.gmra.mxu0 %v1879
    %v2496 = vpop.f32.mrf.mxu0
    %v2497 = vadd.f32 %v2176, %v2496
    %v2498 = vpop.f32.mrf.mxu0
    %v2499 = vpop.f32.mrf.mxu0
    %v2500 = vadd.f32 %v2179, %v2499
    %v2501 = vpop.f32.mrf.mxu0
    %2502 = vmatprep.mubr.bf16.mxu0 0
    %2503 = vmatmul.mubr.bf16.gmra.mxu0 %v1882
    %v2504 = vpop.f32.mrf.mxu0
    %v2505 = vadd.f32 %v2184, %v2504
    %v2506 = vpop.f32.mrf.mxu0
    %v2507 = vpop.f32.mrf.mxu0
    %v2508 = vadd.f32 %v2187, %v2507
    %v2509 = vpop.f32.mrf.mxu0
    %2510 = vmatprep.mubr.bf16.mxu0 0
    %2511 = vmatmul.mubr.bf16.gmra.mxu0 %v1885
    %v2512 = vpop.f32.mrf.mxu0
    %v2513 = vadd.f32 %v2192, %v2512
    %v2514 = vpop.f32.mrf.mxu0
    %v2515 = vpop.f32.mrf.mxu0
    %v2516 = vadd.f32 %v2195, %v2515
    %v2517 = vpop.f32.mrf.mxu0
    %2518 = vmatprep.mubr.bf16.mxu0 0
    %2519 = vmatmul.mubr.bf16.gmra.mxu0 %v1888
    %v2520 = vpop.f32.mrf.mxu0
    %v2521 = vadd.f32 %v2200, %v2520
    %v2522 = vpop.f32.mrf.mxu0
    %v2523 = vpop.f32.mrf.mxu0
    %v2524 = vadd.f32 %v2203, %v2523
    %v2525 = vpop.f32.mrf.mxu0
    %2526 = vmatprep.mubr.bf16.mxu0 0
    %2527 = vmatmul.mubr.bf16.gmra.mxu0 %v1891
    %v2528 = vpop.f32.mrf.mxu0
    %v2529 = vadd.f32 %v2208, %v2528
    %v2530 = vpop.f32.mrf.mxu0
    %v2531 = vpop.f32.mrf.mxu0
    %v2532 = vadd.f32 %v2211, %v2531
    %v2533 = vpop.f32.mrf.mxu0
    %2534 = vdwg.mxu0
    %v2535 = vmax.f32 %v2249, 0.0
    %v2536 = vmax.f32 %v2252, 0.0
    %v2537 = vmax.f32 %v2257, 0.0
    %v2538 = vmax.f32 %v2260, 0.0
    %v2539 = vmax.f32 %v2265, 0.0
    %v2540 = vmax.f32 %v2268, 0.0
    %v2541 = vmax.f32 %v2273, 0.0
    %v2542 = vmax.f32 %v2276, 0.0
    %v2543 = vmax.f32 %v2281, 0.0
    %v2544 = vmax.f32 %v2284, 0.0
    %v2545 = vmax.f32 %v2289, 0.0
    %v2546 = vmax.f32 %v2292, 0.0
    %v2547 = vmax.f32 %v2297, 0.0
    %v2548 = vmax.f32 %v2300, 0.0
    %v2549 = vmax.f32 %v2305, 0.0
    %v2550 = vmax.f32 %v2308, 0.0
    %v2551 = vmax.f32 %v2313, 0.0
    %v2552 = vmax.f32 %v2316, 0.0
    %v2553 = vmax.f32 %v2321, 0.0
    %v2554 = vmax.f32 %v2324, 0.0
    %v2555 = vmax.f32 %v2329, 0.0
    %v2556 = vmax.f32 %v2332, 0.0
    %v2557 = vmax.f32 %v2337, 0.0
    %v2558 = vmax.f32 %v2340, 0.0
    %v2559 = vmax.f32 %v2345, 0.0
    %v2560 = vmax.f32 %v2348, 0.0
    %v2561 = vmax.f32 %v2353, 0.0
    %v2562 = vmax.f32 %v2356, 0.0
    %v2563 = vmax.f32 %v2361, 0.0
    %v2564 = vmax.f32 %v2364, 0.0
    %v2565 = vmax.f32 %v2369, 0.0
    %v2566 = vmax.f32 %v2372, 0.0
    %v2567 = vmax.f32 %v2377, 0.0
    %v2568 = vmax.f32 %v2380, 0.0
    %v2569 = vmax.f32 %v2385, 0.0
    %v2570 = vmax.f32 %v2388, 0.0
    %v2571 = vmax.f32 %v2393, 0.0
    %v2572 = vmax.f32 %v2396, 0.0
    %v2573 = vmax.f32 %v2401, 0.0
    %v2574 = vmax.f32 %v2404, 0.0
    %v2575 = vmax.f32 %v2409, 0.0
    %v2576 = vmax.f32 %v2412, 0.0
    %v2577 = vmax.f32 %v2417, 0.0
    %v2578 = vmax.f32 %v2420, 0.0
    %v2579 = vmax.f32 %v2425, 0.0
    %v2580 = vmax.f32 %v2428, 0.0
    %v2581 = vmax.f32 %v2433, 0.0
    %v2582 = vmax.f32 %v2436, 0.0
    %v2583 = vmax.f32 %v2441, 0.0
    %v2584 = vmax.f32 %v2444, 0.0
    %v2585 = vmax.f32 %v2449, 0.0
    %v2586 = vmax.f32 %v2452, 0.0
    %v2587 = vmax.f32 %v2457, 0.0
    %v2588 = vmax.f32 %v2460, 0.0
    %v2589 = vmax.f32 %v2465, 0.0
    %v2590 = vmax.f32 %v2468, 0.0
    %v2591 = vmax.f32 %v2473, 0.0
    %v2592 = vmax.f32 %v2476, 0.0
    %v2593 = vmax.f32 %v2481, 0.0
    %v2594 = vmax.f32 %v2484, 0.0
    %v2595 = vmax.f32 %v2489, 0.0
    %v2596 = vmax.f32 %v2492, 0.0
    %v2597 = vmax.f32 %v2497, 0.0
    %v2598 = vmax.f32 %v2500, 0.0
    %v2599 = vmax.f32 %v2505, 0.0
    %v2600 = vmax.f32 %v2508, 0.0
    %v2601 = vmax.f32 %v2513, 0.0
    %v2602 = vmax.f32 %v2516, 0.0
    %v2603 = vmax.f32 %v2521, 0.0
    %v2604 = vmax.f32 %v2524, 0.0
    %v2605 = vmax.f32 %v2529, 0.0
    %v2606 = vmax.f32 %v2532, 0.0
    %v2607 = vld [vmem:[%s5] sm:$0xff]
    %v2608 = vld [vmem:[%s5 + $0x8] sm:$0xff]
    %v2609 = vld [vmem:[%s5 + $0x10] sm:$0xff]
    %v2610 = vld [vmem:[%s5 + $0x18] sm:$0xff]
    %v2611 = vld [vmem:[%s5 + $0x20] sm:$0xff]
    %v2612 = vld [vmem:[%s5 + $0x28] sm:$0xff]
    %v2613 = vld [vmem:[%s5 + $0x30] sm:$0xff]
    %v2614 = vld [vmem:[%s5 + $0x38] sm:$0xff]
    %v2615 = vld [vmem:[%s5 + $0x40] sm:$0xff]
    %v2616 = vld [vmem:[%s5 + $0x48] sm:$0xff]
    %v2617 = vld [vmem:[%s5 + $0x50] sm:$0xff]
    %v2618 = vld [vmem:[%s5 + $0x58] sm:$0xff]
    %v2619 = vld [vmem:[%s5 + $0x60] sm:$0xff]
    %v2620 = vld [vmem:[%s5 + $0x68] sm:$0xff]
    %v2621 = vld [vmem:[%s5 + $0x70] sm:$0xff]
    %v2622 = vld [vmem:[%s5 + $0x78] sm:$0xff]
    %v2623 = vld [vmem:[%s5 + $0x80] sm:$0xff]
    %v2624 = vld [vmem:[%s5 + $0x88] sm:$0xff]
    %v2625 = vld [vmem:[%s5 + $0x90] sm:$0xff]
    %v2626 = vld [vmem:[%s5 + $0x98] sm:$0xff]
    %v2627 = vld [vmem:[%s5 + $0xa0] sm:$0xff]
    %v2628 = vld [vmem:[%s5 + $0xa8] sm:$0xff]
    %v2629 = vld [vmem:[%s5 + $0xb0] sm:$0xff]
    %v2630 = vld [vmem:[%s5 + $0xb8] sm:$0xff]
    %v2631 = vld [vmem:[%s5 + $0xc0] sm:$0xff]
    %v2632 = vld [vmem:[%s5 + $0xc8] sm:$0xff]
    %v2633 = vld [vmem:[%s5 + $0xd0] sm:$0xff]
    %v2634 = vld [vmem:[%s5 + $0xd8] sm:$0xff]
    %v2635 = vld [vmem:[%s5 + $0xe0] sm:$0xff]
    %v2636 = vld [vmem:[%s5 + $0xe8] sm:$0xff]
    %v2637 = vld [vmem:[%s5 + $0xf0] sm:$0xff]
    %v2638 = vld [vmem:[%s5 + $0xf8] sm:$0xff]
    %v2639 = vld [vmem:[%s5 + $0x100] sm:$0xff]
    %v2640 = vld [vmem:[%s5 + $0x108] sm:$0xff]
    %v2641 = vld [vmem:[%s5 + $0x110] sm:$0xff]
    %v2642 = vld [vmem:[%s5 + $0x118] sm:$0xff]
    %v2643 = vld [vmem:[%s5 + $0x120] sm:$0xff]
    %v2644 = vld [vmem:[%s5 + $0x128] sm:$0xff]
    %v2645 = vld [vmem:[%s5 + $0x130] sm:$0xff]
    %v2646 = vld [vmem:[%s5 + $0x138] sm:$0xff]
    %v2647 = vld [vmem:[%s5 + $0x140] sm:$0xff]
    %v2648 = vld [vmem:[%s5 + $0x148] sm:$0xff]
    %v2649 = vld [vmem:[%s5 + $0x150] sm:$0xff]
    %v2650 = vld [vmem:[%s5 + $0x158] sm:$0xff]
    %v2651 = vld [vmem:[%s5 + $0x160] sm:$0xff]
    %v2652 = vld [vmem:[%s5 + $0x168] sm:$0xff]
    %v2653 = vld [vmem:[%s5 + $0x170] sm:$0xff]
    %v2654 = vld [vmem:[%s5 + $0x178] sm:$0xff]
    %v2655 = vld [vmem:[%s5 + $0x180] sm:$0xff]
    %v2656 = vld [vmem:[%s5 + $0x188] sm:$0xff]
    %v2657 = vld [vmem:[%s5 + $0x190] sm:$0xff]
    %v2658 = vld [vmem:[%s5 + $0x198] sm:$0xff]
    %v2659 = vld [vmem:[%s5 + $0x1a0] sm:$0xff]
    %v2660 = vld [vmem:[%s5 + $0x1a8] sm:$0xff]
    %v2661 = vld [vmem:[%s5 + $0x1b0] sm:$0xff]
    %v2662 = vld [vmem:[%s5 + $0x1b8] sm:$0xff]
    %v2663 = vld [vmem:[%s5 + $0x1c0] sm:$0xff]
    %v2664 = vld [vmem:[%s5 + $0x1c8] sm:$0xff]
    %v2665 = vld [vmem:[%s5 + $0x1d0] sm:$0xff]
    %v2666 = vld [vmem:[%s5 + $0x1d8] sm:$0xff]
    %v2667 = vld [vmem:[%s5 + $0x1e0] sm:$0xff]
    %v2668 = vld [vmem:[%s5 + $0x1e8] sm:$0xff]
    %v2669 = vld [vmem:[%s5 + $0x1f0] sm:$0xff]
    %v2670 = vld [vmem:[%s5 + $0x1f8] sm:$0xff]
    %v2671 = vld [vmem:[%s5 + $0x200] sm:$0xff]
    %v2672 = vld [vmem:[%s5 + $0x208] sm:$0xff]
    %v2673 = vld [vmem:[%s5 + $0x210] sm:$0xff]
    %v2674 = vld [vmem:[%s5 + $0x218] sm:$0xff]
    %v2675 = vld [vmem:[%s5 + $0x220] sm:$0xff]
    %v2676 = vld [vmem:[%s5 + $0x228] sm:$0xff]
    %v2677 = vld [vmem:[%s5 + $0x230] sm:$0xff]
    %v2678 = vld [vmem:[%s5 + $0x238] sm:$0xff]
    %2680 = vset.pattern.permute.xlu0 0
    %2681 = vperm.xlu0 %2680, %v2607
    %v2682 = vpop.permute.xlu0 %2681
    %2685 = vset.pattern.permute.xlu0 0
    %2686 = vperm.xlu0 %2685, %v2608
    %v2687 = vpop.permute.xlu0 %2686
    %2690 = vset.pattern.permute.xlu0 0
    %2691 = vperm.xlu0 %2690, %v2609
    %v2692 = vpop.permute.xlu0 %2691
    %2695 = vset.pattern.permute.xlu0 0
    %2696 = vperm.xlu0 %2695, %v2610
    %v2697 = vpop.permute.xlu0 %2696
    %2700 = vset.pattern.permute.xlu0 0
    %2701 = vperm.xlu0 %2700, %v2611
    %v2702 = vpop.permute.xlu0 %2701
    %2705 = vset.pattern.permute.xlu0 0
    %2706 = vperm.xlu0 %2705, %v2612
    %v2707 = vpop.permute.xlu0 %2706
    %2710 = vset.pattern.permute.xlu0 0
    %2711 = vperm.xlu0 %2710, %v2613
    %v2712 = vpop.permute.xlu0 %2711
    %2715 = vset.pattern.permute.xlu0 0
    %2716 = vperm.xlu0 %2715, %v2614
    %v2717 = vpop.permute.xlu0 %2716
    %2720 = vset.pattern.permute.xlu0 0
    %2721 = vperm.xlu0 %2720, %v2615
    %v2722 = vpop.permute.xlu0 %2721
    %2725 = vset.pattern.permute.xlu0 0
    %2726 = vperm.xlu0 %2725, %v2616
    %v2727 = vpop.permute.xlu0 %2726
    %2730 = vset.pattern.permute.xlu0 0
    %2731 = vperm.xlu0 %2730, %v2617
    %v2732 = vpop.permute.xlu0 %2731
    %2735 = vset.pattern.permute.xlu0 0
    %2736 = vperm.xlu0 %2735, %v2618
    %v2737 = vpop.permute.xlu0 %2736
    %2740 = vset.pattern.permute.xlu0 0
    %2741 = vperm.xlu0 %2740, %v2619
    %v2742 = vpop.permute.xlu0 %2741
    %2745 = vset.pattern.permute.xlu0 0
    %2746 = vperm.xlu0 %2745, %v2620
    %v2747 = vpop.permute.xlu0 %2746
    %2750 = vset.pattern.permute.xlu0 0
    %2751 = vperm.xlu0 %2750, %v2621
    %v2752 = vpop.permute.xlu0 %2751
    %2755 = vset.pattern.permute.xlu0 0
    %2756 = vperm.xlu0 %2755, %v2622
    %v2757 = vpop.permute.xlu0 %2756
    %2760 = vset.pattern.permute.xlu0 0
    %2761 = vperm.xlu0 %2760, %v2623
    %v2762 = vpop.permute.xlu0 %2761
    %2765 = vset.pattern.permute.xlu0 0
    %2766 = vperm.xlu0 %2765, %v2624
    %v2767 = vpop.permute.xlu0 %2766
    %2770 = vset.pattern.permute.xlu0 0
    %2771 = vperm.xlu0 %2770, %v2625
    %v2772 = vpop.permute.xlu0 %2771
    %2775 = vset.pattern.permute.xlu0 0
    %2776 = vperm.xlu0 %2775, %v2626
    %v2777 = vpop.permute.xlu0 %2776
    %2780 = vset.pattern.permute.xlu0 0
    %2781 = vperm.xlu0 %2780, %v2627
    %v2782 = vpop.permute.xlu0 %2781
    %2785 = vset.pattern.permute.xlu0 0
    %2786 = vperm.xlu0 %2785, %v2628
    %v2787 = vpop.permute.xlu0 %2786
    %2790 = vset.pattern.permute.xlu0 0
    %2791 = vperm.xlu0 %2790, %v2629
    %v2792 = vpop.permute.xlu0 %2791
    %2795 = vset.pattern.permute.xlu0 0
    %2796 = vperm.xlu0 %2795, %v2630
    %v2797 = vpop.permute.xlu0 %2796
    %2800 = vset.pattern.permute.xlu0 0
    %2801 = vperm.xlu0 %2800, %v2631
    %v2802 = vpop.permute.xlu0 %2801
    %2805 = vset.pattern.permute.xlu0 0
    %2806 = vperm.xlu0 %2805, %v2632
    %v2807 = vpop.permute.xlu0 %2806
    %2810 = vset.pattern.permute.xlu0 0
    %2811 = vperm.xlu0 %2810, %v2633
    %v2812 = vpop.permute.xlu0 %2811
    %2815 = vset.pattern.permute.xlu0 0
    %2816 = vperm.xlu0 %2815, %v2634
    %v2817 = vpop.permute.xlu0 %2816
    %2820 = vset.pattern.permute.xlu0 0
    %2821 = vperm.xlu0 %2820, %v2635
    %v2822 = vpop.permute.xlu0 %2821
    %2825 = vset.pattern.permute.xlu0 0
    %2826 = vperm.xlu0 %2825, %v2636
    %v2827 = vpop.permute.xlu0 %2826
    %2830 = vset.pattern.permute.xlu0 0
    %2831 = vperm.xlu0 %2830, %v2637
    %v2832 = vpop.permute.xlu0 %2831
    %2835 = vset.pattern.permute.xlu0 0
    %2836 = vperm.xlu0 %2835, %v2638
    %v2837 = vpop.permute.xlu0 %2836
    %2840 = vset.pattern.permute.xlu0 0
    %2841 = vperm.xlu0 %2840, %v2639
    %v2842 = vpop.permute.xlu0 %2841
    %2845 = vset.pattern.permute.xlu0 0
    %2846 = vperm.xlu0 %2845, %v2640
    %v2847 = vpop.permute.xlu0 %2846
    %2850 = vset.pattern.permute.xlu0 0
    %2851 = vperm.xlu0 %2850, %v2641
    %v2852 = vpop.permute.xlu0 %2851
    %2855 = vset.pattern.permute.xlu0 0
    %2856 = vperm.xlu0 %2855, %v2642
    %v2857 = vpop.permute.xlu0 %2856
    %2860 = vset.pattern.permute.xlu0 0
    %2861 = vperm.xlu0 %2860, %v2643
    %v2862 = vpop.permute.xlu0 %2861
    %2865 = vset.pattern.permute.xlu0 0
    %2866 = vperm.xlu0 %2865, %v2644
    %v2867 = vpop.permute.xlu0 %2866
    %2870 = vset.pattern.permute.xlu0 0
    %2871 = vperm.xlu0 %2870, %v2645
    %v2872 = vpop.permute.xlu0 %2871
    %2875 = vset.pattern.permute.xlu0 0
    %2876 = vperm.xlu0 %2875, %v2646
    %v2877 = vpop.permute.xlu0 %2876
    %2880 = vset.pattern.permute.xlu0 0
    %2881 = vperm.xlu0 %2880, %v2647
    %v2882 = vpop.permute.xlu0 %2881
    %2885 = vset.pattern.permute.xlu0 0
    %2886 = vperm.xlu0 %2885, %v2648
    %v2887 = vpop.permute.xlu0 %2886
    %2890 = vset.pattern.permute.xlu0 0
    %2891 = vperm.xlu0 %2890, %v2649
    %v2892 = vpop.permute.xlu0 %2891
    %2895 = vset.pattern.permute.xlu0 0
    %2896 = vperm.xlu0 %2895, %v2650
    %v2897 = vpop.permute.xlu0 %2896
    %2900 = vset.pattern.permute.xlu0 0
    %2901 = vperm.xlu0 %2900, %v2651
    %v2902 = vpop.permute.xlu0 %2901
    %2905 = vset.pattern.permute.xlu0 0
    %2906 = vperm.xlu0 %2905, %v2652
    %v2907 = vpop.permute.xlu0 %2906
    %2910 = vset.pattern.permute.xlu0 0
    %2911 = vperm.xlu0 %2910, %v2653
    %v2912 = vpop.permute.xlu0 %2911
    %2915 = vset.pattern.permute.xlu0 0
    %2916 = vperm.xlu0 %2915, %v2654
    %v2917 = vpop.permute.xlu0 %2916
    %2920 = vset.pattern.permute.xlu0 0
    %2921 = vperm.xlu0 %2920, %v2655
    %v2922 = vpop.permute.xlu0 %2921
    %2925 = vset.pattern.permute.xlu0 0
    %2926 = vperm.xlu0 %2925, %v2656
    %v2927 = vpop.permute.xlu0 %2926
    %2930 = vset.pattern.permute.xlu0 0
    %2931 = vperm.xlu0 %2930, %v2657
    %v2932 = vpop.permute.xlu0 %2931
    %2935 = vset.pattern.permute.xlu0 0
    %2936 = vperm.xlu0 %2935, %v2658
    %v2937 = vpop.permute.xlu0 %2936
    %2940 = vset.pattern.permute.xlu0 0
    %2941 = vperm.xlu0 %2940, %v2659
    %v2942 = vpop.permute.xlu0 %2941
    %2945 = vset.pattern.permute.xlu0 0
    %2946 = vperm.xlu0 %2945, %v2660
    %v2947 = vpop.permute.xlu0 %2946
    %2950 = vset.pattern.permute.xlu0 0
    %2951 = vperm.xlu0 %2950, %v2661
    %v2952 = vpop.permute.xlu0 %2951
    %2955 = vset.pattern.permute.xlu0 0
    %2956 = vperm.xlu0 %2955, %v2662
    %v2957 = vpop.permute.xlu0 %2956
    %2960 = vset.pattern.permute.xlu0 0
    %2961 = vperm.xlu0 %2960, %v2663
    %v2962 = vpop.permute.xlu0 %2961
    %2965 = vset.pattern.permute.xlu0 0
    %2966 = vperm.xlu0 %2965, %v2664
    %v2967 = vpop.permute.xlu0 %2966
    %2970 = vset.pattern.permute.xlu0 0
    %2971 = vperm.xlu0 %2970, %v2665
    %v2972 = vpop.permute.xlu0 %2971
    %2975 = vset.pattern.permute.xlu0 0
    %2976 = vperm.xlu0 %2975, %v2666
    %v2977 = vpop.permute.xlu0 %2976
    %2980 = vset.pattern.permute.xlu0 0
    %2981 = vperm.xlu0 %2980, %v2667
    %v2982 = vpop.permute.xlu0 %2981
    %2985 = vset.pattern.permute.xlu0 0
    %2986 = vperm.xlu0 %2985, %v2668
    %v2987 = vpop.permute.xlu0 %2986
    %2990 = vset.pattern.permute.xlu0 0
    %2991 = vperm.xlu0 %2990, %v2669
    %v2992 = vpop.permute.xlu0 %2991
    %2995 = vset.pattern.permute.xlu0 0
    %2996 = vperm.xlu0 %2995, %v2670
    %v2997 = vpop.permute.xlu0 %2996
    %3000 = vset.pattern.permute.xlu0 0
    %3001 = vperm.xlu0 %3000, %v2671
    %v3002 = vpop.permute.xlu0 %3001
    %3005 = vset.pattern.permute.xlu0 0
    %3006 = vperm.xlu0 %3005, %v2672
    %v3007 = vpop.permute.xlu0 %3006
    %3010 = vset.pattern.permute.xlu0 0
    %3011 = vperm.xlu0 %3010, %v2673
    %v3012 = vpop.permute.xlu0 %3011
    %3015 = vset.pattern.permute.xlu0 0
    %3016 = vperm.xlu0 %3015, %v2674
    %v3017 = vpop.permute.xlu0 %3016
    %3020 = vset.pattern.permute.xlu0 0
    %3021 = vperm.xlu0 %3020, %v2675
    %v3022 = vpop.permute.xlu0 %3021
    %3025 = vset.pattern.permute.xlu0 0
    %3026 = vperm.xlu0 %3025, %v2676
    %v3027 = vpop.permute.xlu0 %3026
    %3030 = vset.pattern.permute.xlu0 0
    %3031 = vperm.xlu0 %3030, %v2677
    %v3032 = vpop.permute.xlu0 %3031
    %3035 = vset.pattern.permute.xlu0 0
    %3036 = vperm.xlu0 %3035, %v2678
    %v3037 = vpop.permute.xlu0 %3036
    %v3039 = vmul.f32 %v2535, %v2682
    %v3040 = vmul.f32 %v2536, %v2687
    %v3041 = vmul.f32 %v2537, %v2692
    %v3042 = vmul.f32 %v2538, %v2697
    %v3043 = vmul.f32 %v2539, %v2702
    %v3044 = vmul.f32 %v2540, %v2707
    %v3045 = vmul.f32 %v2541, %v2712
    %v3046 = vmul.f32 %v2542, %v2717
    %v3047 = vmul.f32 %v2543, %v2722
    %v3048 = vmul.f32 %v2544, %v2727
    %v3049 = vmul.f32 %v2545, %v2732
    %v3050 = vmul.f32 %v2546, %v2737
    %v3051 = vmul.f32 %v2547, %v2742
    %v3052 = vmul.f32 %v2548, %v2747
    %v3053 = vmul.f32 %v2549, %v2752
    %v3054 = vmul.f32 %v2550, %v2757
    %v3055 = vmul.f32 %v2551, %v2762
    %v3056 = vmul.f32 %v2552, %v2767
    %v3057 = vmul.f32 %v2553, %v2772
    %v3058 = vmul.f32 %v2554, %v2777
    %v3059 = vmul.f32 %v2555, %v2782
    %v3060 = vmul.f32 %v2556, %v2787
    %v3061 = vmul.f32 %v2557, %v2792
    %v3062 = vmul.f32 %v2558, %v2797
    %v3063 = vmul.f32 %v2559, %v2802
    %v3064 = vmul.f32 %v2560, %v2807
    %v3065 = vmul.f32 %v2561, %v2812
    %v3066 = vmul.f32 %v2562, %v2817
    %v3067 = vmul.f32 %v2563, %v2822
    %v3068 = vmul.f32 %v2564, %v2827
    %v3069 = vmul.f32 %v2565, %v2832
    %v3070 = vmul.f32 %v2566, %v2837
    %v3071 = vmul.f32 %v2567, %v2842
    %v3072 = vmul.f32 %v2568, %v2847
    %v3073 = vmul.f32 %v2569, %v2852
    %v3074 = vmul.f32 %v2570, %v2857
    %v3075 = vmul.f32 %v2571, %v2862
    %v3076 = vmul.f32 %v2572, %v2867
    %v3077 = vmul.f32 %v2573, %v2872
    %v3078 = vmul.f32 %v2574, %v2877
    %v3079 = vmul.f32 %v2575, %v2882
    %v3080 = vmul.f32 %v2576, %v2887
    %v3081 = vmul.f32 %v2577, %v2892
    %v3082 = vmul.f32 %v2578, %v2897
    %v3083 = vmul.f32 %v2579, %v2902
    %v3084 = vmul.f32 %v2580, %v2907
    %v3085 = vmul.f32 %v2581, %v2912
    %v3086 = vmul.f32 %v2582, %v2917
    %v3087 = vmul.f32 %v2583, %v2922
    %v3088 = vmul.f32 %v2584, %v2927
    %v3089 = vmul.f32 %v2585, %v2932
    %v3090 = vmul.f32 %v2586, %v2937
    %v3091 = vmul.f32 %v2587, %v2942
    %v3092 = vmul.f32 %v2588, %v2947
    %v3093 = vmul.f32 %v2589, %v2952
    %v3094 = vmul.f32 %v2590, %v2957
    %v3095 = vmul.f32 %v2591, %v2962
    %v3096 = vmul.f32 %v2592, %v2967
    %v3097 = vmul.f32 %v2593, %v2972
    %v3098 = vmul.f32 %v2594, %v2977
    %v3099 = vmul.f32 %v2595, %v2982
    %v3100 = vmul.f32 %v2596, %v2987
    %v3101 = vmul.f32 %v2597, %v2992
    %v3102 = vmul.f32 %v2598, %v2997
    %v3103 = vmul.f32 %v2599, %v3002
    %v3104 = vmul.f32 %v2600, %v3007
    %v3105 = vmul.f32 %v2601, %v3012
    %v3106 = vmul.f32 %v2602, %v3017
    %v3107 = vmul.f32 %v2603, %v3022
    %v3108 = vmul.f32 %v2604, %v3027
    %v3109 = vmul.f32 %v2605, %v3032
    %v3110 = vmul.f32 %v2606, %v3037
    %v3111 = vadd.f32 %v3039, %v3040
    %v3112 = vadd.f32 %v3111, %v3041
    %v3113 = vadd.f32 %v3112, %v3042
    %v3114 = vadd.f32 %v3113, %v3043
    %v3115 = vadd.f32 %v3114, %v3044
    %v3116 = vadd.f32 %v3115, %v3045
    %v3117 = vadd.f32 %v3116, %v3046
    %v3118 = vadd.f32 %v3117, %v3047
    %v3119 = vadd.f32 %v3118, %v3048
    %v3120 = vadd.f32 %v3119, %v3049
    %v3121 = vadd.f32 %v3120, %v3050
    %v3122 = vadd.f32 %v3121, %v3051
    %v3123 = vadd.f32 %v3122, %v3052
    %v3124 = vadd.f32 %v3123, %v3053
    %v3125 = vadd.f32 %v3124, %v3054
    %v3126 = vadd.f32 %v3125, %v3055
    %v3127 = vadd.f32 %v3126, %v3056
    %v3128 = vadd.f32 %v3127, %v3057
    %v3129 = vadd.f32 %v3128, %v3058
    %v3130 = vadd.f32 %v3129, %v3059
    %v3131 = vadd.f32 %v3130, %v3060
    %v3132 = vadd.f32 %v3131, %v3061
    %v3133 = vadd.f32 %v3132, %v3062
    %v3134 = vadd.f32 %v3133, %v3063
    %v3135 = vadd.f32 %v3134, %v3064
    %v3136 = vadd.f32 %v3135, %v3065
    %v3137 = vadd.f32 %v3136, %v3066
    %v3138 = vadd.f32 %v3137, %v3067
    %v3139 = vadd.f32 %v3138, %v3068
    %v3140 = vadd.f32 %v3139, %v3069
    %v3141 = vadd.f32 %v3140, %v3070
    %v3142 = vadd.f32 %v3141, %v3071
    %v3143 = vadd.f32 %v3142, %v3072
    %v3144 = vadd.f32 %v3143, %v3073
    %v3145 = vadd.f32 %v3144, %v3074
    %v3146 = vadd.f32 %v3145, %v3075
    %v3147 = vadd.f32 %v3146, %v3076
    %v3148 = vadd.f32 %v3147, %v3077
    %v3149 = vadd.f32 %v3148, %v3078
    %v3150 = vadd.f32 %v3149, %v3079
    %v3151 = vadd.f32 %v3150, %v3080
    %v3152 = vadd.f32 %v3151, %v3081
    %v3153 = vadd.f32 %v3152, %v3082
    %v3154 = vadd.f32 %v3153, %v3083
    %v3155 = vadd.f32 %v3154, %v3084
    %v3156 = vadd.f32 %v3155, %v3085
    %v3157 = vadd.f32 %v3156, %v3086
    %v3158 = vadd.f32 %v3157, %v3087
    %v3159 = vadd.f32 %v3158, %v3088
    %v3160 = vadd.f32 %v3159, %v3089
    %v3161 = vadd.f32 %v3160, %v3090
    %v3162 = vadd.f32 %v3161, %v3091
    %v3163 = vadd.f32 %v3162, %v3092
    %v3164 = vadd.f32 %v3163, %v3093
    %v3165 = vadd.f32 %v3164, %v3094
    %v3166 = vadd.f32 %v3165, %v3095
    %v3167 = vadd.f32 %v3166, %v3096
    %v3168 = vadd.f32 %v3167, %v3097
    %v3169 = vadd.f32 %v3168, %v3098
    %v3170 = vadd.f32 %v3169, %v3099
    %v3171 = vadd.f32 %v3170, %v3100
    %v3172 = vadd.f32 %v3171, %v3101
    %v3173 = vadd.f32 %v3172, %v3102
    %v3174 = vadd.f32 %v3173, %v3103
    %v3175 = vadd.f32 %v3174, %v3104
    %v3176 = vadd.f32 %v3175, %v3105
    %v3177 = vadd.f32 %v3176, %v3106
    %v3178 = vadd.f32 %v3177, %v3107
    %v3179 = vadd.f32 %v3178, %v3108
    %v3180 = vadd.f32 %v3179, %v3109
    %v3181 = vadd.f32 %v3180, %v3110
    %v3182 = vrot.slane %v3181, 4
    %v3183 = vadd.f32 %v3181, %v3182
    %v3184 = vrot.slane %v3183, 2
    %v3185 = vadd.f32 %v3183, %v3184
    %v3186 = vrot.slane %v3185, 1
    %v3187 = vadd.f32 %v3185, %v3186
    %v3188 = vld [vmem:[#allocation2] sm:$0x1]
    %3190 = vset.pattern.permute.xlu0 0
    %3191 = vperm.xlu0 %3190, %v3188
    %v3192 = vpop.permute.xlu0 %3191
    %v3194 = vlaneseq
    %v3195 = vshrl.u32 %v3194, 7
    %v3196 = vsub.s32 0, %v3195
    %v3197 = vrot.slane %v3192, %v3196
    %v3198 = vadd.f32 %v3187, %v3197
    %v3199 = vsub.f32 0.0, %v3198
    %v3200 = vmul.f32 %v3199, 1.442695
    %v3201 = vpow.pop %v3200
    %v3202 = vadd.f32 %v3201, 1.0
    %v3203 = vrcp.pop %v3202
    %3204 = vst [vmem:[#allocation3] sm:$0x1] %v3203
    // Predicated region
    $region30: #{tpu_custom_call.1} parent=1 // pred_check
      _
    $region31: #{tpu_custom_call.1} parent=1 // pred_check_branch
      %3206 = sbr.rel (0) target = $region33
    $region32: #{tpu_custom_call.1} parent=1 // pred_region
      %s3208 = ssub.s32 16, 16
      %3209 = vsyncadd [#allocation4], %s3208
      %s3211 = sshll.u32 [#allocation3], 4
      %s3212 = int_to_ptr.vmem [resolvable:$true] %s3211
      %3214 = dma.vmem_to_hbm [thread:$0]  %s3212, 16, %s7, [#allocation4]
    $region33: #{tpu_custom_call.1} parent=1 // pred_fallthru
      _
    // Predicated region
    $region34: #{tpu_custom_call.1} parent=1 // pred_check
      _
    $region35: #{tpu_custom_call.1} parent=1 // pred_check_branch
      %3216 = sbr.rel (0) target = $region37
    $region36: #{tpu_custom_call.1} parent=1 // pred_region
      %3217 = dma.done [#allocation4], 16
    $region37: #{tpu_custom_call.1} parent=1 // pred_fallthru
      _
    %3218 = vsyncpa [#allocation4], 1

</llo_original>
